<compile_context>
chip_gen: v7x
topology: tpu7x:2x2x1
jax: 0.10.0
libtpu: 0.0.40
codegen_flags: <defaults>
</compile_context>

<pallas_src>
import functools

import jax
import jax.numpy as jnp
import numpy as np
from jax.experimental import pallas as pl
from jax.experimental.pallas import tpu as pltpu

EPS = 1e-5  # torch.nn.GroupNorm default


def _round_up(v, m):
    return (v + m - 1) // m * m


def _encoder_conv_kernel(x_ref, w_ref, b_ref, g_ref, be_ref, m_ref, grp_ref,
                         o_ref, patch_ref, *, cin_blk, hp, wp):
    """One sample: in-VMEM im2col -> one MXU matmul -> GroupNorm -> ReLU."""
    p_pad = x_ref.shape[2]
    x = x_ref[0]                                           # (Cin_blk, P_pad) f32

    # ---- in-kernel im2col: 27 lane-shifted copies into the patch scratch ------
    # Output voxel at flat padded position p needs the input at p + off(tap).
    # Interior positions never run off the padded grid, so a static lane shift is
    # exact there; wrapped values only land on non-interior lanes (masked out of
    # the stats and discarded by the wrapper).
    t = 0
    for kd in range(3):
        for kh in range(3):
            for kw in range(3):
                off = (kd - 1) * hp * wp + (kh - 1) * wp + (kw - 1)
                s = off % p_pad                            # static python int
                if s == 0:
                    shifted = x
                else:
                    # == jnp.roll(x, -off, axis=1): shifted[:, p] = x[:, p + off]
                    shifted = jnp.concatenate([x[:, s:], x[:, :s]], axis=1)
                patch_ref[t * cin_blk:(t + 1) * cin_blk, :] = shifted
                t += 1

    # ---- Conv3d: single folded matmul (Cout, K) x (K, P_pad) on the MXU -------
    acc = jnp.dot(w_ref[...], patch_ref[...],
                  preferred_element_type=jnp.float32)      # (Cout, P_pad) f32
    acc = acc + b_ref[...]                                 # + (Cout, 1)

    # ---- GroupNorm (two-pass, masked) + affine + ReLU, fully vectorized -------
    m = m_ref[...]                                         # (1, P_pad): 1.0 interior
    grp = grp_ref[...]                                     # (Cout, Cout) block-diag / (cg*DHW)
    row_sum = jnp.sum(acc * m, axis=-1, keepdims=True)     # (Cout, 1)
    mean = jnp.dot(grp, row_sum, preferred_element_type=jnp.float32)   # (Cout, 1)
    cent = (acc - mean) * m
    row_var = jnp.sum(cent * cent, axis=-1, keepdims=True)
    var = jnp.dot(grp, row_var, preferred_element_type=jnp.float32)    # (Cout, 1)
    rstd = jax.lax.rsqrt(var + EPS)
    scale = rstd * g_ref[...]                              # (Cout, 1)
    offset = be_ref[...] - mean * scale                    # (Cout, 1)
    o_ref[0] = jnp.maximum(acc * scale + offset, 0.0).astype(o_ref.dtype)


def encoder_conv(x, weight, bias, gamma, beta, num_groups):
    """x: (N, Cin, D, H, W) f32; weight: (Cout, Cin, 3, 3, 3); returns NCDHW f32."""
    n, cin, d, h, w = x.shape
    cout = weight.shape[0]
    assert cout % num_groups == 0, "GroupNorm requires cout % num_groups == 0"
    cg = cout // num_groups
    dp, hp, wp = d + 2, h + 2, w + 2
    p_true = dp * hp * wp
    p_pad = _round_up(p_true, 128)              # lane-dense blocks & stores
    cin_blk = _round_up(cin, 8)                 # 8-row-aligned per-tap slots
    k_pad = 27 * cin_blk
    dhw = d * h * w

    # ---- glue (plain JAX): zero-pad spatially + channel-pad, flatten ----------
    xp = jnp.pad(x.astype(jnp.float32),
                 ((0, 0), (0, cin_blk - cin), (1, 1), (1, 1), (1, 1)))
    xp = xp.reshape(n, cin_blk, p_true)
    xp = jnp.pad(xp, ((0, 0), (0, 0), (0, p_pad - p_true)))

    # Folded weights: column t*cin_blk + c  <->  tap t = (kd, kh, kw), channel c.
    wt = jnp.transpose(weight.astype(jnp.float32), (0, 2, 3, 4, 1))   # (Cout,3,3,3,Cin)
    wt = jnp.pad(wt, ((0, 0), (0, 0), (0, 0), (0, 0), (0, cin_blk - cin)))
    w_fold = wt.reshape(cout, k_pad)

    # Interior mask over the flattened padded grid (1 inside, 0 on pad/lane tail).
    mask = jnp.pad(jnp.ones((d, h, w), jnp.float32), ((1, 1), (1, 1), (1, 1)))
    mask = jnp.pad(mask.reshape(1, p_true), ((0, 0), (0, p_pad - p_true)))

    # Group-indicator matrix (block-diagonal ones), pre-scaled by 1/(cg*DHW):
    # one tiny matmul both reduces row stats within a group and broadcasts back.
    gid = np.arange(cout) // cg
    grp_mat = jnp.asarray((gid[:, None] == gid[None, :]).astype(np.float32)
                          / float(cg * dhw))

    b2 = bias.reshape(cout, 1).astype(jnp.float32)
    g2 = gamma.reshape(cout, 1).astype(jnp.float32)
    be2 = beta.reshape(cout, 1).astype(jnp.float32)

    kernel = functools.partial(_encoder_conv_kernel, cin_blk=cin_blk, hp=hp, wp=wp)

    # VMEM budget: double-buffered in/out blocks + patch scratch (+ small params).
    # Re-derive per generation; keep below ~48-56 MiB headroom on v7x (64 MiB VMEM).
    blk_bytes = 4 * (2 * cin_blk * p_pad + 2 * cout * p_pad + k_pad * p_pad
                     + cout * k_pad + p_pad + cout * (cout + 3))
    vmem_limit = int(min(100 * 1024 * 1024, max(32 * 1024 * 1024, 2 * blk_bytes)))

    out = pl.pallas_call(
        kernel,
        out_shape=jax.ShapeDtypeStruct((n, cout, p_pad), jnp.float32),
        grid_spec=pltpu.PrefetchScalarGridSpec(
            num_scalar_prefetch=0,
            grid=(n,),
            in_specs=[
                pl.BlockSpec((1, cin_blk, p_pad), lambda i: (i, 0, 0)),   # padded x
                pl.BlockSpec((cout, k_pad), lambda i: (0, 0)),            # folded W
                pl.BlockSpec((cout, 1), lambda i: (0, 0)),                # bias
                pl.BlockSpec((cout, 1), lambda i: (0, 0)),                # gamma
                pl.BlockSpec((cout, 1), lambda i: (0, 0)),                # beta
                pl.BlockSpec((1, p_pad), lambda i: (0, 0)),               # interior mask
                pl.BlockSpec((cout, cout), lambda i: (0, 0)),             # group matrix
            ],
            out_specs=pl.BlockSpec((1, cout, p_pad), lambda i: (i, 0, 0)),
            scratch_shapes=[pltpu.VMEM((k_pad, p_pad), jnp.float32)],
        ),
        compiler_params=pltpu.CompilerParams(
            dimension_semantics=("parallel",),
            vmem_limit_bytes=vmem_limit),
    )(xp, w_fold, b2, g2, be2, mask, grp_mat)

    # Drop the lane tail + spatial padding: (N, Cout, P_pad) -> NCDHW.
    out = out[:, :, :p_true].reshape(n, cout, dp, hp, wp)
    return out[:, :, 1:1 + d, 1:1 + h, 1:1 + w]


def encoder_conv_ref(x, weight, bias, gamma, beta, num_groups):
    """Pure-JAX f32 reference matching torch semantics."""
    y = jax.lax.conv_general_dilated(
        x, weight, window_strides=(1, 1, 1), padding=[(1, 1)] * 3,
        dimension_numbers=("NCDHW", "OIDHW", "NCDHW"))
    y = y + bias.reshape(1, -1, 1, 1, 1)
    n, c, d, h, w = y.shape
    cg = c // num_groups
    yg = y.reshape(n, num_groups, cg, d, h, w)
    mean = yg.mean(axis=(2, 3, 4, 5), keepdims=True)
    var = ((yg - mean) ** 2).mean(axis=(2, 3, 4, 5), keepdims=True)
    yn = ((yg - mean) * jax.lax.rsqrt(var + EPS)).reshape(n, c, d, h, w)
    yn = yn * gamma.reshape(1, -1, 1, 1, 1) + beta.reshape(1, -1, 1, 1, 1)
    return jnp.maximum(yn, 0.0)


if __name__ == "__main__":
    key = jax.random.PRNGKey(0)
    k1, k2, k3, k4, k5 = jax.random.split(key, 5)

    in_ch, out_ch = 4, 8
    n, d, h, w = 2, 4, 8, 8
    num_groups = out_ch // 4

    x = jax.random.normal(k1, (n, in_ch, d, h, w), jnp.float32)
    weight = 0.1 * jax.random.normal(k2, (out_ch, in_ch, 3, 3, 3), jnp.float32)
    bias = 0.1 * jax.random.normal(k3, (out_ch,), jnp.float32)
    gamma = 1.0 + 0.1 * jax.random.normal(k4, (out_ch,), jnp.float32)
    beta = 0.1 * jax.random.normal(k5, (out_ch,), jnp.float32)

    out = encoder_conv(x, weight, bias, gamma, beta, num_groups)
    out = jax.block_until_ready(out)

    ref = encoder_conv_ref(x, weight, bias, gamma, beta, num_groups)
    np.testing.assert_allclose(np.asarray(out), np.asarray(ref),
                               rtol=3e-2, atol=3e-2)
    print("KERNEL_OK")
</pallas_src>

<mosaic_0001>
module attributes {stable_mosaic.version = 11 : i64} {
  func.func @_encoder_conv_kernel(%arg0: i32, %arg1: memref<1x8x640xf32, #tpu.memory_space<vmem>>, %arg2: memref<8x216xf32, #tpu.memory_space<vmem>>, %arg3: memref<8x1xf32, #tpu.memory_space<vmem>>, %arg4: memref<8x1xf32, #tpu.memory_space<vmem>>, %arg5: memref<8x1xf32, #tpu.memory_space<vmem>>, %arg6: memref<1x640xf32, #tpu.memory_space<vmem>>, %arg7: memref<8x8xf32, #tpu.memory_space<vmem>>, %arg8: memref<1x8x640xf32, #tpu.memory_space<vmem>>, %arg9: memref<216x640xf32, #tpu.memory_space<vmem>>) attributes {dimension_semantics = [#tpu.dimension_semantics<parallel>], iteration_bounds = array<i64: 2>, scalar_prefetch = 0 : i64, scratch_operands = 1 : i64, tpu.core_type = #tpu.core_type<tc>, window_params = [{transform_indices = @transform_0, window_bounds = array<i64: 1, 8, 640>}, {pipeline_mode = #tpu.pipeline_mode<synchronous>, transform_indices = @transform_1, window_bounds = array<i64: 8, 216>}, {pipeline_mode = #tpu.pipeline_mode<synchronous>, transform_indices = @transform_2, window_bounds = array<i64: 8, 1>}, {pipeline_mode = #tpu.pipeline_mode<synchronous>, transform_indices = @transform_3, window_bounds = array<i64: 8, 1>}, {pipeline_mode = #tpu.pipeline_mode<synchronous>, transform_indices = @transform_4, window_bounds = array<i64: 8, 1>}, {pipeline_mode = #tpu.pipeline_mode<synchronous>, transform_indices = @transform_5, window_bounds = array<i64: 1, 640>}, {pipeline_mode = #tpu.pipeline_mode<synchronous>, transform_indices = @transform_6, window_bounds = array<i64: 8, 8>}, {transform_indices = @transform_7, window_bounds = array<i64: 1, 8, 640>}]} {
    %c0 = arith.constant 0 : index
    %c0_0 = arith.constant 0 : index
    %c0_1 = arith.constant 0 : index
    %0 = vector.load %arg1[%c0, %c0_0, %c0_1] : memref<1x8x640xf32, #tpu.memory_space<vmem>>, vector<1x8x640xf32>
    %1 = vector.shape_cast %0 : vector<1x8x640xf32> to vector<8x640xf32>
    %2 = vector.extract_strided_slice %1 {offsets = [0, 529], sizes = [8, 111], strides = [1, 1]} : vector<8x640xf32> to vector<8x111xf32>
    %3 = vector.extract_strided_slice %1 {offsets = [0, 0], sizes = [8, 529], strides = [1, 1]} : vector<8x640xf32> to vector<8x529xf32>
    %4 = tpu.concatenate %2, %3 in 1 : vector<8x111xf32>, vector<8x529xf32> -> vector<8x640xf32>
    %c0_2 = arith.constant 0 : index
    %c0_3 = arith.constant 0 : index
    %5 = vector.load %arg9[%c0_2, %c0_3] : memref<216x640xf32, #tpu.memory_space<vmem>>, vector<8x640xf32>
    tpu.vector_store %arg9[%c0_2, %c0_3], %4 {strides = array<i32>} : memref<216x640xf32, #tpu.memory_space<vmem>>, vector<8x640xf32>,
    %6 = vector.extract_strided_slice %1 {offsets = [0, 530], sizes = [8, 110], strides = [1, 1]} : vector<8x640xf32> to vector<8x110xf32>
    %7 = vector.extract_strided_slice %1 {offsets = [0, 0], sizes = [8, 530], strides = [1, 1]} : vector<8x640xf32> to vector<8x530xf32>
    %8 = tpu.concatenate %6, %7 in 1 : vector<8x110xf32>, vector<8x530xf32> -> vector<8x640xf32>
    %c8 = arith.constant 8 : index
    %c0_4 = arith.constant 0 : index
    %9 = vector.load %arg9[%c8, %c0_4] : memref<216x640xf32, #tpu.memory_space<vmem>>, vector<8x640xf32>
    tpu.vector_store %arg9[%c8, %c0_4], %8 {strides = array<i32>} : memref<216x640xf32, #tpu.memory_space<vmem>>, vector<8x640xf32>,
    %10 = vector.extract_strided_slice %1 {offsets = [0, 531], sizes = [8, 109], strides = [1, 1]} : vector<8x640xf32> to vector<8x109xf32>
    %11 = vector.extract_strided_slice %1 {offsets = [0, 0], sizes = [8, 531], strides = [1, 1]} : vector<8x640xf32> to vector<8x531xf32>
    %12 = tpu.concatenate %10, %11 in 1 : vector<8x109xf32>, vector<8x531xf32> -> vector<8x640xf32>
    %c16 = arith.constant 16 : index
    %c0_5 = arith.constant 0 : index
    %13 = vector.load %arg9[%c16, %c0_5] : memref<216x640xf32, #tpu.memory_space<vmem>>, vector<8x640xf32>
    tpu.vector_store %arg9[%c16, %c0_5], %12 {strides = array<i32>} : memref<216x640xf32, #tpu.memory_space<vmem>>, vector<8x640xf32>,
    %14 = vector.extract_strided_slice %1 {offsets = [0, 539], sizes = [8, 101], strides = [1, 1]} : vector<8x640xf32> to vector<8x101xf32>
    %15 = vector.extract_strided_slice %1 {offsets = [0, 0], sizes = [8, 539], strides = [1, 1]} : vector<8x640xf32> to vector<8x539xf32>
    %16 = tpu.concatenate %14, %15 in 1 : vector<8x101xf32>, vector<8x539xf32> -> vector<8x640xf32>
    %c24 = arith.constant 24 : index
    %c0_6 = arith.constant 0 : index
    %17 = vector.load %arg9[%c24, %c0_6] : memref<216x640xf32, #tpu.memory_space<vmem>>, vector<8x640xf32>
    tpu.vector_store %arg9[%c24, %c0_6], %16 {strides = array<i32>} : memref<216x640xf32, #tpu.memory_space<vmem>>, vector<8x640xf32>,
    %18 = vector.extract_strided_slice %1 {offsets = [0, 540], sizes = [8, 100], strides = [1, 1]} : vector<8x640xf32> to vector<8x100xf32>
    %19 = vector.extract_strided_slice %1 {offsets = [0, 0], sizes = [8, 540], strides = [1, 1]} : vector<8x640xf32> to vector<8x540xf32>
    %20 = tpu.concatenate %18, %19 in 1 : vector<8x100xf32>, vector<8x540xf32> -> vector<8x640xf32>
    %c32 = arith.constant 32 : index
    %c0_7 = arith.constant 0 : index
    %21 = vector.load %arg9[%c32, %c0_7] : memref<216x640xf32, #tpu.memory_space<vmem>>, vector<8x640xf32>
    tpu.vector_store %arg9[%c32, %c0_7], %20 {strides = array<i32>} : memref<216x640xf32, #tpu.memory_space<vmem>>, vector<8x640xf32>,
    %22 = vector.extract_strided_slice %1 {offsets = [0, 541], sizes = [8, 99], strides = [1, 1]} : vector<8x640xf32> to vector<8x99xf32>
    %23 = vector.extract_strided_slice %1 {offsets = [0, 0], sizes = [8, 541], strides = [1, 1]} : vector<8x640xf32> to vector<8x541xf32>
    %24 = tpu.concatenate %22, %23 in 1 : vector<8x99xf32>, vector<8x541xf32> -> vector<8x640xf32>
    %c40 = arith.constant 40 : index
    %c0_8 = arith.constant 0 : index
    %25 = vector.load %arg9[%c40, %c0_8] : memref<216x640xf32, #tpu.memory_space<vmem>>, vector<8x640xf32>
    tpu.vector_store %arg9[%c40, %c0_8], %24 {strides = array<i32>} : memref<216x640xf32, #tpu.memory_space<vmem>>, vector<8x640xf32>,
    %26 = vector.extract_strided_slice %1 {offsets = [0, 549], sizes = [8, 91], strides = [1, 1]} : vector<8x640xf32> to vector<8x91xf32>
    %27 = vector.extract_strided_slice %1 {offsets = [0, 0], sizes = [8, 549], strides = [1, 1]} : vector<8x640xf32> to vector<8x549xf32>
    %28 = tpu.concatenate %26, %27 in 1 : vector<8x91xf32>, vector<8x549xf32> -> vector<8x640xf32>
    %c48 = arith.constant 48 : index
    %c0_9 = arith.constant 0 : index
    %29 = vector.load %arg9[%c48, %c0_9] : memref<216x640xf32, #tpu.memory_space<vmem>>, vector<8x640xf32>
    tpu.vector_store %arg9[%c48, %c0_9], %28 {strides = array<i32>} : memref<216x640xf32, #tpu.memory_space<vmem>>, vector<8x640xf32>,
    %30 = vector.extract_strided_slice %1 {offsets = [0, 550], sizes = [8, 90], strides = [1, 1]} : vector<8x640xf32> to vector<8x90xf32>
    %31 = vector.extract_strided_slice %1 {offsets = [0, 0], sizes = [8, 550], strides = [1, 1]} : vector<8x640xf32> to vector<8x550xf32>
    %32 = tpu.concatenate %30, %31 in 1 : vector<8x90xf32>, vector<8x550xf32> -> vector<8x640xf32>
    %c56 = arith.constant 56 : index
    %c0_10 = arith.constant 0 : index
    %33 = vector.load %arg9[%c56, %c0_10] : memref<216x640xf32, #tpu.memory_space<vmem>>, vector<8x640xf32>
    tpu.vector_store %arg9[%c56, %c0_10], %32 {strides = array<i32>} : memref<216x640xf32, #tpu.memory_space<vmem>>, vector<8x640xf32>,
    %34 = vector.extract_strided_slice %1 {offsets = [0, 551], sizes = [8, 89], strides = [1, 1]} : vector<8x640xf32> to vector<8x89xf32>
    %35 = vector.extract_strided_slice %1 {offsets = [0, 0], sizes = [8, 551], strides = [1, 1]} : vector<8x640xf32> to vector<8x551xf32>
    %36 = tpu.concatenate %34, %35 in 1 : vector<8x89xf32>, vector<8x551xf32> -> vector<8x640xf32>
    %c64 = arith.constant 64 : index
    %c0_11 = arith.constant 0 : index
    %37 = vector.load %arg9[%c64, %c0_11] : memref<216x640xf32, #tpu.memory_space<vmem>>, vector<8x640xf32>
    tpu.vector_store %arg9[%c64, %c0_11], %36 {strides = array<i32>} : memref<216x640xf32, #tpu.memory_space<vmem>>, vector<8x640xf32>,
    %38 = vector.extract_strided_slice %1 {offsets = [0, 629], sizes = [8, 11], strides = [1, 1]} : vector<8x640xf32> to vector<8x11xf32>
    %39 = vector.extract_strided_slice %1 {offsets = [0, 0], sizes = [8, 629], strides = [1, 1]} : vector<8x640xf32> to vector<8x629xf32>
    %40 = tpu.concatenate %38, %39 in 1 : vector<8x11xf32>, vector<8x629xf32> -> vector<8x640xf32>
    %c72 = arith.constant 72 : index
    %c0_12 = arith.constant 0 : index
    %41 = vector.load %arg9[%c72, %c0_12] : memref<216x640xf32, #tpu.memory_space<vmem>>, vector<8x640xf32>
    tpu.vector_store %arg9[%c72, %c0_12], %40 {strides = array<i32>} : memref<216x640xf32, #tpu.memory_space<vmem>>, vector<8x640xf32>,
    %42 = vector.extract_strided_slice %1 {offsets = [0, 630], sizes = [8, 10], strides = [1, 1]} : vector<8x640xf32> to vector<8x10xf32>
    %43 = vector.extract_strided_slice %1 {offsets = [0, 0], sizes = [8, 630], strides = [1, 1]} : vector<8x640xf32> to vector<8x630xf32>
    %44 = tpu.concatenate %42, %43 in 1 : vector<8x10xf32>, vector<8x630xf32> -> vector<8x640xf32>
    %c80 = arith.constant 80 : index
    %c0_13 = arith.constant 0 : index
    %45 = vector.load %arg9[%c80, %c0_13] : memref<216x640xf32, #tpu.memory_space<vmem>>, vector<8x640xf32>
    tpu.vector_store %arg9[%c80, %c0_13], %44 {strides = array<i32>} : memref<216x640xf32, #tpu.memory_space<vmem>>, vector<8x640xf32>,
    %46 = vector.extract_strided_slice %1 {offsets = [0, 631], sizes = [8, 9], strides = [1, 1]} : vector<8x640xf32> to vector<8x9xf32>
    %47 = vector.extract_strided_slice %1 {offsets = [0, 0], sizes = [8, 631], strides = [1, 1]} : vector<8x640xf32> to vector<8x631xf32>
    %48 = tpu.concatenate %46, %47 in 1 : vector<8x9xf32>, vector<8x631xf32> -> vector<8x640xf32>
    %c88 = arith.constant 88 : index
    %c0_14 = arith.constant 0 : index
    %49 = vector.load %arg9[%c88, %c0_14] : memref<216x640xf32, #tpu.memory_space<vmem>>, vector<8x640xf32>
    tpu.vector_store %arg9[%c88, %c0_14], %48 {strides = array<i32>} : memref<216x640xf32, #tpu.memory_space<vmem>>, vector<8x640xf32>,
    %50 = vector.extract_strided_slice %1 {offsets = [0, 639], sizes = [8, 1], strides = [1, 1]} : vector<8x640xf32> to vector<8x1xf32>
    %51 = vector.extract_strided_slice %1 {offsets = [0, 0], sizes = [8, 639], strides = [1, 1]} : vector<8x640xf32> to vector<8x639xf32>
    %52 = tpu.concatenate %50, %51 in 1 : vector<8x1xf32>, vector<8x639xf32> -> vector<8x640xf32>
    %c96 = arith.constant 96 : index
    %c0_15 = arith.constant 0 : index
    %53 = vector.load %arg9[%c96, %c0_15] : memref<216x640xf32, #tpu.memory_space<vmem>>, vector<8x640xf32>
    tpu.vector_store %arg9[%c96, %c0_15], %52 {strides = array<i32>} : memref<216x640xf32, #tpu.memory_space<vmem>>, vector<8x640xf32>,
    %c104 = arith.constant 104 : index
    %c0_16 = arith.constant 0 : index
    %54 = vector.load %arg9[%c104, %c0_16] : memref<216x640xf32, #tpu.memory_space<vmem>>, vector<8x640xf32>
    tpu.vector_store %arg9[%c104, %c0_16], %1 {strides = array<i32>} : memref<216x640xf32, #tpu.memory_space<vmem>>, vector<8x640xf32>,
    %55 = vector.extract_strided_slice %1 {offsets = [0, 1], sizes = [8, 639], strides = [1, 1]} : vector<8x640xf32> to vector<8x639xf32>
    %56 = vector.extract_strided_slice %1 {offsets = [0, 0], sizes = [8, 1], strides = [1, 1]} : vector<8x640xf32> to vector<8x1xf32>
    %57 = tpu.concatenate %55, %56 in 1 : vector<8x639xf32>, vector<8x1xf32> -> vector<8x640xf32>
    %c112 = arith.constant 112 : index
    %c0_17 = arith.constant 0 : index
    %58 = vector.load %arg9[%c112, %c0_17] : memref<216x640xf32, #tpu.memory_space<vmem>>, vector<8x640xf32>
    tpu.vector_store %arg9[%c112, %c0_17], %57 {strides = array<i32>} : memref<216x640xf32, #tpu.memory_space<vmem>>, vector<8x640xf32>,
    %59 = vector.extract_strided_slice %1 {offsets = [0, 9], sizes = [8, 631], strides = [1, 1]} : vector<8x640xf32> to vector<8x631xf32>
    %60 = vector.extract_strided_slice %1 {offsets = [0, 0], sizes = [8, 9], strides = [1, 1]} : vector<8x640xf32> to vector<8x9xf32>
    %61 = tpu.concatenate %59, %60 in 1 : vector<8x631xf32>, vector<8x9xf32> -> vector<8x640xf32>
    %c120 = arith.constant 120 : index
    %c0_18 = arith.constant 0 : index
    %62 = vector.load %arg9[%c120, %c0_18] : memref<216x640xf32, #tpu.memory_space<vmem>>, vector<8x640xf32>
    tpu.vector_store %arg9[%c120, %c0_18], %61 {strides = array<i32>} : memref<216x640xf32, #tpu.memory_space<vmem>>, vector<8x640xf32>,
    %63 = vector.extract_strided_slice %1 {offsets = [0, 10], sizes = [8, 630], strides = [1, 1]} : vector<8x640xf32> to vector<8x630xf32>
    %64 = vector.extract_strided_slice %1 {offsets = [0, 0], sizes = [8, 10], strides = [1, 1]} : vector<8x640xf32> to vector<8x10xf32>
    %65 = tpu.concatenate %63, %64 in 1 : vector<8x630xf32>, vector<8x10xf32> -> vector<8x640xf32>
    %c128 = arith.constant 128 : index
    %c0_19 = arith.constant 0 : index
    %66 = vector.load %arg9[%c128, %c0_19] : memref<216x640xf32, #tpu.memory_space<vmem>>, vector<8x640xf32>
    tpu.vector_store %arg9[%c128, %c0_19], %65 {strides = array<i32>} : memref<216x640xf32, #tpu.memory_space<vmem>>, vector<8x640xf32>,
    %67 = vector.extract_strided_slice %1 {offsets = [0, 11], sizes = [8, 629], strides = [1, 1]} : vector<8x640xf32> to vector<8x629xf32>
    %68 = vector.extract_strided_slice %1 {offsets = [0, 0], sizes = [8, 11], strides = [1, 1]} : vector<8x640xf32> to vector<8x11xf32>
    %69 = tpu.concatenate %67, %68 in 1 : vector<8x629xf32>, vector<8x11xf32> -> vector<8x640xf32>
    %c136 = arith.constant 136 : index
    %c0_20 = arith.constant 0 : index
    %70 = vector.load %arg9[%c136, %c0_20] : memref<216x640xf32, #tpu.memory_space<vmem>>, vector<8x640xf32>
    tpu.vector_store %arg9[%c136, %c0_20], %69 {strides = array<i32>} : memref<216x640xf32, #tpu.memory_space<vmem>>, vector<8x640xf32>,
    %71 = vector.extract_strided_slice %1 {offsets = [0, 89], sizes = [8, 551], strides = [1, 1]} : vector<8x640xf32> to vector<8x551xf32>
    %72 = vector.extract_strided_slice %1 {offsets = [0, 0], sizes = [8, 89], strides = [1, 1]} : vector<8x640xf32> to vector<8x89xf32>
    %73 = tpu.concatenate %71, %72 in 1 : vector<8x551xf32>, vector<8x89xf32> -> vector<8x640xf32>
    %c144 = arith.constant 144 : index
    %c0_21 = arith.constant 0 : index
    %74 = vector.load %arg9[%c144, %c0_21] : memref<216x640xf32, #tpu.memory_space<vmem>>, vector<8x640xf32>
    tpu.vector_store %arg9[%c144, %c0_21], %73 {strides = array<i32>} : memref<216x640xf32, #tpu.memory_space<vmem>>, vector<8x640xf32>,
    %75 = vector.extract_strided_slice %1 {offsets = [0, 90], sizes = [8, 550], strides = [1, 1]} : vector<8x640xf32> to vector<8x550xf32>
    %76 = vector.extract_strided_slice %1 {offsets = [0, 0], sizes = [8, 90], strides = [1, 1]} : vector<8x640xf32> to vector<8x90xf32>
    %77 = tpu.concatenate %75, %76 in 1 : vector<8x550xf32>, vector<8x90xf32> -> vector<8x640xf32>
    %c152 = arith.constant 152 : index
    %c0_22 = arith.constant 0 : index
    %78 = vector.load %arg9[%c152, %c0_22] : memref<216x640xf32, #tpu.memory_space<vmem>>, vector<8x640xf32>
    tpu.vector_store %arg9[%c152, %c0_22], %77 {strides = array<i32>} : memref<216x640xf32, #tpu.memory_space<vmem>>, vector<8x640xf32>,
    %79 = vector.extract_strided_slice %1 {offsets = [0, 91], sizes = [8, 549], strides = [1, 1]} : vector<8x640xf32> to vector<8x549xf32>
    %80 = vector.extract_strided_slice %1 {offsets = [0, 0], sizes = [8, 91], strides = [1, 1]} : vector<8x640xf32> to vector<8x91xf32>
    %81 = tpu.concatenate %79, %80 in 1 : vector<8x549xf32>, vector<8x91xf32> -> vector<8x640xf32>
    %c160 = arith.constant 160 : index
    %c0_23 = arith.constant 0 : index
    %82 = vector.load %arg9[%c160, %c0_23] : memref<216x640xf32, #tpu.memory_space<vmem>>, vector<8x640xf32>
    tpu.vector_store %arg9[%c160, %c0_23], %81 {strides = array<i32>} : memref<216x640xf32, #tpu.memory_space<vmem>>, vector<8x640xf32>,
    %83 = vector.extract_strided_slice %1 {offsets = [0, 99], sizes = [8, 541], strides = [1, 1]} : vector<8x640xf32> to vector<8x541xf32>
    %84 = vector.extract_strided_slice %1 {offsets = [0, 0], sizes = [8, 99], strides = [1, 1]} : vector<8x640xf32> to vector<8x99xf32>
    %85 = tpu.concatenate %83, %84 in 1 : vector<8x541xf32>, vector<8x99xf32> -> vector<8x640xf32>
    %c168 = arith.constant 168 : index
    %c0_24 = arith.constant 0 : index
    %86 = vector.load %arg9[%c168, %c0_24] : memref<216x640xf32, #tpu.memory_space<vmem>>, vector<8x640xf32>
    tpu.vector_store %arg9[%c168, %c0_24], %85 {strides = array<i32>} : memref<216x640xf32, #tpu.memory_space<vmem>>, vector<8x640xf32>,
    %87 = vector.extract_strided_slice %1 {offsets = [0, 100], sizes = [8, 540], strides = [1, 1]} : vector<8x640xf32> to vector<8x540xf32>
    %88 = vector.extract_strided_slice %1 {offsets = [0, 0], sizes = [8, 100], strides = [1, 1]} : vector<8x640xf32> to vector<8x100xf32>
    %89 = tpu.concatenate %87, %88 in 1 : vector<8x540xf32>, vector<8x100xf32> -> vector<8x640xf32>
    %c176 = arith.constant 176 : index
    %c0_25 = arith.constant 0 : index
    %90 = vector.load %arg9[%c176, %c0_25] : memref<216x640xf32, #tpu.memory_space<vmem>>, vector<8x640xf32>
    tpu.vector_store %arg9[%c176, %c0_25], %89 {strides = array<i32>} : memref<216x640xf32, #tpu.memory_space<vmem>>, vector<8x640xf32>,
    %91 = vector.extract_strided_slice %1 {offsets = [0, 101], sizes = [8, 539], strides = [1, 1]} : vector<8x640xf32> to vector<8x539xf32>
    %92 = vector.extract_strided_slice %1 {offsets = [0, 0], sizes = [8, 101], strides = [1, 1]} : vector<8x640xf32> to vector<8x101xf32>
    %93 = tpu.concatenate %91, %92 in 1 : vector<8x539xf32>, vector<8x101xf32> -> vector<8x640xf32>
    %c184 = arith.constant 184 : index
    %c0_26 = arith.constant 0 : index
    %94 = vector.load %arg9[%c184, %c0_26] : memref<216x640xf32, #tpu.memory_space<vmem>>, vector<8x640xf32>
    tpu.vector_store %arg9[%c184, %c0_26], %93 {strides = array<i32>} : memref<216x640xf32, #tpu.memory_space<vmem>>, vector<8x640xf32>,
    %95 = vector.extract_strided_slice %1 {offsets = [0, 109], sizes = [8, 531], strides = [1, 1]} : vector<8x640xf32> to vector<8x531xf32>
    %96 = vector.extract_strided_slice %1 {offsets = [0, 0], sizes = [8, 109], strides = [1, 1]} : vector<8x640xf32> to vector<8x109xf32>
    %97 = tpu.concatenate %95, %96 in 1 : vector<8x531xf32>, vector<8x109xf32> -> vector<8x640xf32>
    %c192 = arith.constant 192 : index
    %c0_27 = arith.constant 0 : index
    %98 = vector.load %arg9[%c192, %c0_27] : memref<216x640xf32, #tpu.memory_space<vmem>>, vector<8x640xf32>
    tpu.vector_store %arg9[%c192, %c0_27], %97 {strides = array<i32>} : memref<216x640xf32, #tpu.memory_space<vmem>>, vector<8x640xf32>,
    %99 = vector.extract_strided_slice %1 {offsets = [0, 110], sizes = [8, 530], strides = [1, 1]} : vector<8x640xf32> to vector<8x530xf32>
    %100 = vector.extract_strided_slice %1 {offsets = [0, 0], sizes = [8, 110], strides = [1, 1]} : vector<8x640xf32> to vector<8x110xf32>
    %101 = tpu.concatenate %99, %100 in 1 : vector<8x530xf32>, vector<8x110xf32> -> vector<8x640xf32>
    %c200 = arith.constant 200 : index
    %c0_28 = arith.constant 0 : index
    %102 = vector.load %arg9[%c200, %c0_28] : memref<216x640xf32, #tpu.memory_space<vmem>>, vector<8x640xf32>
    tpu.vector_store %arg9[%c200, %c0_28], %101 {strides = array<i32>} : memref<216x640xf32, #tpu.memory_space<vmem>>, vector<8x640xf32>,
    %103 = vector.extract_strided_slice %1 {offsets = [0, 111], sizes = [8, 529], strides = [1, 1]} : vector<8x640xf32> to vector<8x529xf32>
    %104 = vector.extract_strided_slice %1 {offsets = [0, 0], sizes = [8, 111], strides = [1, 1]} : vector<8x640xf32> to vector<8x111xf32>
    %105 = tpu.concatenate %103, %104 in 1 : vector<8x529xf32>, vector<8x111xf32> -> vector<8x640xf32>
    %c208 = arith.constant 208 : index
    %c0_29 = arith.constant 0 : index
    %106 = vector.load %arg9[%c208, %c0_29] : memref<216x640xf32, #tpu.memory_space<vmem>>, vector<8x640xf32>
    tpu.vector_store %arg9[%c208, %c0_29], %105 {strides = array<i32>} : memref<216x640xf32, #tpu.memory_space<vmem>>, vector<8x640xf32>,
    %c0_30 = arith.constant 0 : index
    %c0_31 = arith.constant 0 : index
    %107 = vector.load %arg2[%c0_30, %c0_31] : memref<8x216xf32, #tpu.memory_space<vmem>>, vector<8x216xf32>
    %c0_32 = arith.constant 0 : index
    %c0_33 = arith.constant 0 : index
    %108 = vector.load %arg9[%c0_32, %c0_33] : memref<216x640xf32, #tpu.memory_space<vmem>>, vector<216x640xf32>
    %cst = arith.constant dense<0.000000e+00> : vector<8x640xf32>
    %109 = tpu.matmul %107, %108, %cst {dimension_numbers = #tpu.dot_dimension_numbers<[1], [0], [0], [1], [0, 0, 1, 1], [], []>} : vector<8x216xf32>, vector<216x640xf32>, vector<8x640xf32> -> vector<8x640xf32>
    %c0_34 = arith.constant 0 : index
    %c0_35 = arith.constant 0 : index
    %110 = vector.load %arg3[%c0_34, %c0_35] : memref<8x1xf32, #tpu.memory_space<vmem>>, vector<8x1xf32>
    %111 = vector.broadcast %110 : vector<8x1xf32> to vector<8x640xf32>
    %112 = arith.addf %109, %111 : vector<8x640xf32>
    %c0_36 = arith.constant 0 : index
    %c0_37 = arith.constant 0 : index
    %113 = vector.load %arg6[%c0_36, %c0_37] : memref<1x640xf32, #tpu.memory_space<vmem>>, vector<1x640xf32>
    %c0_38 = arith.constant 0 : index
    %c0_39 = arith.constant 0 : index
    %114 = vector.load %arg7[%c0_38, %c0_39] : memref<8x8xf32, #tpu.memory_space<vmem>>, vector<8x8xf32>
    %115 = vector.broadcast %113 : vector<1x640xf32> to vector<8x640xf32>
    %116 = arith.mulf %112, %115 : vector<8x640xf32>
    %cst_40 = arith.constant dense<0.000000e+00> : vector<8xf32>
    %117 = vector.multi_reduction <add>, %116, %cst_40 [1] : vector<8x640xf32> to vector<8xf32>
    %118 = vector.shape_cast %117 : vector<8xf32> to vector<8x1xf32>
    %cst_41 = arith.constant dense<0.000000e+00> : vector<8x1xf32>
    %119 = tpu.matmul %114, %118, %cst_41 {dimension_numbers = #tpu.dot_dimension_numbers<[1], [0], [0], [1], [0, 0, 1, 1], [], []>} : vector<8x8xf32>, vector<8x1xf32>, vector<8x1xf32> -> vector<8x1xf32>
    %120 = vector.broadcast %119 : vector<8x1xf32> to vector<8x640xf32>
    %121 = arith.subf %112, %120 : vector<8x640xf32>
    %122 = vector.broadcast %113 : vector<1x640xf32> to vector<8x640xf32>
    %123 = arith.mulf %121, %122 : vector<8x640xf32>
    %124 = arith.mulf %123, %123 : vector<8x640xf32>
    %cst_42 = arith.constant dense<0.000000e+00> : vector<8xf32>
    %125 = vector.multi_reduction <add>, %124, %cst_42 [1] : vector<8x640xf32> to vector<8xf32>
    %126 = vector.shape_cast %125 : vector<8xf32> to vector<8x1xf32>
    %cst_43 = arith.constant dense<0.000000e+00> : vector<8x1xf32>
    %127 = tpu.matmul %114, %126, %cst_43 {dimension_numbers = #tpu.dot_dimension_numbers<[1], [0], [0], [1], [0, 0, 1, 1], [], []>} : vector<8x8xf32>, vector<8x1xf32>, vector<8x1xf32> -> vector<8x1xf32>
    %cst_44 = arith.constant 9.99999974E-6 : f32
    %128 = vector.broadcast %cst_44 : f32 to vector<8x1xf32>
    %129 = arith.addf %127, %128 : vector<8x1xf32>
    %130 = math.rsqrt %129 : vector<8x1xf32>
    %c0_45 = arith.constant 0 : index
    %c0_46 = arith.constant 0 : index
    %131 = vector.load %arg4[%c0_45, %c0_46] : memref<8x1xf32, #tpu.memory_space<vmem>>, vector<8x1xf32>
    %132 = arith.mulf %130, %131 : vector<8x1xf32>
    %c0_47 = arith.constant 0 : index
    %c0_48 = arith.constant 0 : index
    %133 = vector.load %arg5[%c0_47, %c0_48] : memref<8x1xf32, #tpu.memory_space<vmem>>, vector<8x1xf32>
    %134 = arith.mulf %119, %132 : vector<8x1xf32>
    %135 = arith.subf %133, %134 : vector<8x1xf32>
    %136 = vector.broadcast %132 : vector<8x1xf32> to vector<8x640xf32>
    %137 = arith.mulf %112, %136 : vector<8x640xf32>
    %138 = vector.broadcast %135 : vector<8x1xf32> to vector<8x640xf32>
    %139 = arith.addf %137, %138 : vector<8x640xf32>
    %cst_49 = arith.constant 0.000000e+00 : f32
    %140 = vector.broadcast %cst_49 : f32 to vector<8x640xf32>
    %141 = arith.maximumf %139, %140 : vector<8x640xf32>
    %c0_50 = arith.constant 0 : index
    %c0_51 = arith.constant 0 : index
    %c0_52 = arith.constant 0 : index
    %142 = vector.load %arg8[%c0_50, %c0_51, %c0_52] : memref<1x8x640xf32, #tpu.memory_space<vmem>>, vector<1x8x640xf32>
    %143 = vector.shape_cast %142 : vector<1x8x640xf32> to vector<8x640xf32>
    %144 = vector.shape_cast %141 : vector<8x640xf32> to vector<1x8x640xf32>
    tpu.vector_store %arg8[%c0_50, %c0_51, %c0_52], %144 {strides = array<i32>} : memref<1x8x640xf32, #tpu.memory_space<vmem>>, vector<1x8x640xf32>,
    return
  }
  func.func @transform_0(%arg0: i32) -> (i32, i32, i32) {
    %c0_i32 = arith.constant 0 : i32
    %c0_i32_0 = arith.constant 0 : i32
    %c0_i32_1 = arith.constant 0 : i32
    return %arg0, %c0_i32, %c0_i32_0 : i32, i32, i32
  }
  func.func @transform_1(%arg0: i32) -> (i32, i32) {
    %c0_i32 = arith.constant 0 : i32
    %c0_i32_0 = arith.constant 0 : i32
    %c0_i32_1 = arith.constant 0 : i32
    return %c0_i32, %c0_i32_0 : i32, i32
  }
  func.func @transform_2(%arg0: i32) -> (i32, i32) {
    %c0_i32 = arith.constant 0 : i32
    %c0_i32_0 = arith.constant 0 : i32
    %c0_i32_1 = arith.constant 0 : i32
    return %c0_i32, %c0_i32_0 : i32, i32
  }
  func.func @transform_3(%arg0: i32) -> (i32, i32) {
    %c0_i32 = arith.constant 0 : i32
    %c0_i32_0 = arith.constant 0 : i32
    %c0_i32_1 = arith.constant 0 : i32
    return %c0_i32, %c0_i32_0 : i32, i32
  }
  func.func @transform_4(%arg0: i32) -> (i32, i32) {
    %c0_i32 = arith.constant 0 : i32
    %c0_i32_0 = arith.constant 0 : i32
    %c0_i32_1 = arith.constant 0 : i32
    return %c0_i32, %c0_i32_0 : i32, i32
  }
  func.func @transform_5(%arg0: i32) -> (i32, i32) {
    %c0_i32 = arith.constant 0 : i32
    %c0_i32_0 = arith.constant 0 : i32
    %c0_i32_1 = arith.constant 0 : i32
    return %c0_i32, %c0_i32_0 : i32, i32
  }
  func.func @transform_6(%arg0: i32) -> (i32, i32) {
    %c0_i32 = arith.constant 0 : i32
    %c0_i32_0 = arith.constant 0 : i32
    %c0_i32_1 = arith.constant 0 : i32
    return %c0_i32, %c0_i32_0 : i32, i32
  }
  func.func @transform_7(%arg0: i32) -> (i32, i32, i32) {
    %c0_i32 = arith.constant 0 : i32
    %c0_i32_0 = arith.constant 0 : i32
    %c0_i32_1 = arith.constant 0 : i32
    return %arg0, %c0_i32, %c0_i32_0 : i32, i32, i32
  }
}

</mosaic_0001>

<llo_original>
// kernel: tpu_custom_call.1
$region0: #{tpu_custom_call.1}
  #allocation0 [shape = 'u32[]', space=smem, size = 0x4, offset = 0x4, fixed_abs, tag = 'smem constant byte address 0x4 - core index']
  #allocation1 [shape = 'u32[144,128]{1,0:T(1,128)}', space=vmem, size = 0x12000, scoped, tag = 'internal scratch']
  #allocation2 [shape = 'f32[216,640]{1,0:T(8,128)}', space=vmem, size = 0x87000, scoped, tag = 'scratch operand']
  %s0 = inlined_call_operand.hbm [shape: f32[2,8,640], index: 0, kind: input, shape index: {}]
  %s1 = inlined_call_operand.vmem [shape: f32[8,216], index: 1, kind: input, shape index: {}]
  %s2 = inlined_call_operand.vmem [shape: f32[8,1], index: 2, kind: input, shape index: {}]
  %s3 = inlined_call_operand.vmem [shape: f32[8,1], index: 3, kind: input, shape index: {}]
  %s4 = inlined_call_operand.vmem [shape: f32[8,1], index: 4, kind: input, shape index: {}]
  %s5 = inlined_call_operand.vmem [shape: f32[1,640], index: 5, kind: input, shape index: {}]
  %s6 = inlined_call_operand.vmem [shape: f32[8,8], index: 6, kind: input, shape index: {}]
  %s7 = inlined_call_operand.hbm [shape: f32[2,8,640], index: 7, kind: output, shape index: {}]
  %s8 = sld [smem:[#allocation0]]
  $region65: #{tpu_custom_call.1} parent=0
    _
  %s10 = ssub.s32 1, %s8
  %s11 = scalar_select 0, %s10, %s8
  $region1: #{tpu_custom_call.1} parent=0
    #allocation3 [shape = 'u8[40960]{0}', space=vmem, size = 0xa000, scoped, tag = 'input window, operand 0']
    #allocation4 [shape = 's32[2]{0}', space=sflag, size = 0x8, scoped, tag = 'scoped memory for tpu_custom_call.1']
    #allocation5 [shape = 's32[2]{0}', space=sflag, size = 0x8, scoped, tag = 'scoped memory for tpu_custom_call.1']
    #allocation6 [shape = 'u8[40960]{0}', space=vmem, size = 0xa000, scoped, tag = 'output window, operand 0']
    %12 = vsyncpa [#allocation4], 0
    %s13 = scalar_lea.sflag [#allocation4], 1
    %14 = vsyncpa %s13, 0
    %15 = vsyncpa [#allocation5], 0
    %s16 = scalar_lea.sflag [#allocation5], 1
    %17 = vsyncpa %s16, 0
    loop: start=0, step=1, limit=4
    $region2: #{tpu_custom_call.1} parent=1 // loop_pre_header
      _
    $region3: #{tpu_custom_call.1} parent=1 // loop_header
      %s19 = sphi 0, %s23
      %p20 = scmp.ge.s32.totalorder %s19, 4
      %s29 = sphi 0, %s31
      %s32 = sphi 0, %s29
      %s33 = sphi 0, %s32
      %s49 = sphi 0, %s33
      %s53 = sphi 0, %s53
      %s55 = sphi 0, %s53
      %s56 = sphi 0, %s55
      %s70 = sphi 0, %s56
      %s74 = sphi 0, %s74
      %s76 = sphi 0, %s74
      %s77 = sphi 0, %s76
      %s91 = sphi 0, %s77
      %s95 = sphi 0, %s95
      %s97 = sphi 0, %s95
      %s98 = sphi 0, %s97
      %s112 = sphi 0, %s98
      %s116 = sphi 0, %s116
      %s118 = sphi 0, %s116
      %s119 = sphi 0, %s118
      %s133 = sphi 0, %s119
      %s137 = sphi 0, %s137
      %s139 = sphi 0, %s137
      %s140 = sphi 0, %s139
      %s154 = sphi 0, %s140
      %s158 = sphi 0, %s158
      %s160 = sphi 0, %s158
      %s161 = sphi 0, %s160
      %s175 = sphi 0, %s161
      %s181 = sphi 0, %s183
      %s184 = sphi 0, %s181
      %s185 = sphi 0, %s184
      %s201 = sphi 0, %s185
    $region4: #{tpu_custom_call.1} parent=1 // loop_header_branch
      %22 = sbr.rel (%p20) target = $region8
    $region5: #{tpu_custom_call.1} parent=1 // loop_body
      %s24 = ssub.s32 %s19, 1
      %s25 = ssub.s32 %s19, 2
      %s26 = sadd.s32 %s19, 1
      %s27 = ssub.s32 %s19, %s26
      %p28 = scmp.eq.s32.totalorder %s27, 0
      %s30 = sadd.s32 %s29, 1
      %s31 = scalar_select %p28, %s29, %s30
      %p34 = pneg %p28
      %p35 = scmp.eq.s32.totalorder %s19, 1
      %p36 = por %p34, %p35
      %p37 = scmp.ne.s32.totalorder %s29, %s32
      %p38 = scmp.eq.s32.totalorder %s19, 0
      %p39 = por %p37, %p38
      %p40 = scmp.ne.s32.totalorder %s29, %s32
      %p41 = scmp.eq.s32.totalorder %s24, 1
      %p42 = por %p40, %p41
      %p43 = scmp.ne.s32.totalorder %s32, %s33
      %p44 = scmp.eq.s32.totalorder %s24, 0
      %p45 = por %p43, %p44
      %p46 = scmp.ne.s32.totalorder %s32, %s33
      %p47 = scmp.eq.s32.totalorder %s25, 1
      %p48 = por %p46, %p47
      %p50 = scmp.ne.s32.totalorder %s33, %s49
      %p51 = scmp.eq.s32.totalorder %s25, 0
      %p52 = por %p50, %p51
      %s54 = sadd.s32 %s53, 1
      %p57 = scmp.eq.s32.totalorder %s19, 1
      %p58 = scmp.ne.s32.totalorder %s53, %s55
      %p59 = scmp.eq.s32.totalorder %s19, 0
      %p60 = por %p58, %p59
      %p61 = scmp.ne.s32.totalorder %s53, %s55
      %p62 = scmp.eq.s32.totalorder %s24, 1
      %p63 = por %p61, %p62
      %p64 = scmp.ne.s32.totalorder %s55, %s56
      %p65 = scmp.eq.s32.totalorder %s24, 0
      %p66 = por %p64, %p65
      %p67 = scmp.ne.s32.totalorder %s55, %s56
      %p68 = scmp.eq.s32.totalorder %s25, 1
      %p69 = por %p67, %p68
      %p71 = scmp.ne.s32.totalorder %s56, %s70
      %p72 = scmp.eq.s32.totalorder %s25, 0
      %p73 = por %p71, %p72
      %s75 = sadd.s32 %s74, 1
      %p78 = scmp.eq.s32.totalorder %s19, 1
      %p79 = scmp.ne.s32.totalorder %s74, %s76
      %p80 = scmp.eq.s32.totalorder %s19, 0
      %p81 = por %p79, %p80
      %p82 = scmp.ne.s32.totalorder %s74, %s76
      %p83 = scmp.eq.s32.totalorder %s24, 1
      %p84 = por %p82, %p83
      %p85 = scmp.ne.s32.totalorder %s76, %s77
      %p86 = scmp.eq.s32.totalorder %s24, 0
      %p87 = por %p85, %p86
      %p88 = scmp.ne.s32.totalorder %s76, %s77
      %p89 = scmp.eq.s32.totalorder %s25, 1
      %p90 = por %p88, %p89
      %p92 = scmp.ne.s32.totalorder %s77, %s91
      %p93 = scmp.eq.s32.totalorder %s25, 0
      %p94 = por %p92, %p93
      %s96 = sadd.s32 %s95, 1
      %p99 = scmp.eq.s32.totalorder %s19, 1
      %p100 = scmp.ne.s32.totalorder %s95, %s97
      %p101 = scmp.eq.s32.totalorder %s19, 0
      %p102 = por %p100, %p101
      %p103 = scmp.ne.s32.totalorder %s95, %s97
      %p104 = scmp.eq.s32.totalorder %s24, 1
      %p105 = por %p103, %p104
      %p106 = scmp.ne.s32.totalorder %s97, %s98
      %p107 = scmp.eq.s32.totalorder %s24, 0
      %p108 = por %p106, %p107
      %p109 = scmp.ne.s32.totalorder %s97, %s98
      %p110 = scmp.eq.s32.totalorder %s25, 1
      %p111 = por %p109, %p110
      %p113 = scmp.ne.s32.totalorder %s98, %s112
      %p114 = scmp.eq.s32.totalorder %s25, 0
      %p115 = por %p113, %p114
      %s117 = sadd.s32 %s116, 1
      %p120 = scmp.eq.s32.totalorder %s19, 1
      %p121 = scmp.ne.s32.totalorder %s116, %s118
      %p122 = scmp.eq.s32.totalorder %s19, 0
      %p123 = por %p121, %p122
      %p124 = scmp.ne.s32.totalorder %s116, %s118
      %p125 = scmp.eq.s32.totalorder %s24, 1
      %p126 = por %p124, %p125
      %p127 = scmp.ne.s32.totalorder %s118, %s119
      %p128 = scmp.eq.s32.totalorder %s24, 0
      %p129 = por %p127, %p128
      %p130 = scmp.ne.s32.totalorder %s118, %s119
      %p131 = scmp.eq.s32.totalorder %s25, 1
      %p132 = por %p130, %p131
      %p134 = scmp.ne.s32.totalorder %s119, %s133
      %p135 = scmp.eq.s32.totalorder %s25, 0
      %p136 = por %p134, %p135
      %s138 = sadd.s32 %s137, 1
      %p141 = scmp.eq.s32.totalorder %s19, 1
      %p142 = scmp.ne.s32.totalorder %s137, %s139
      %p143 = scmp.eq.s32.totalorder %s19, 0
      %p144 = por %p142, %p143
      %p145 = scmp.ne.s32.totalorder %s137, %s139
      %p146 = scmp.eq.s32.totalorder %s24, 1
      %p147 = por %p145, %p146
      %p148 = scmp.ne.s32.totalorder %s139, %s140
      %p149 = scmp.eq.s32.totalorder %s24, 0
      %p150 = por %p148, %p149
      %p151 = scmp.ne.s32.totalorder %s139, %s140
      %p152 = scmp.eq.s32.totalorder %s25, 1
      %p153 = por %p151, %p152
      %p155 = scmp.ne.s32.totalorder %s140, %s154
      %p156 = scmp.eq.s32.totalorder %s25, 0
      %p157 = por %p155, %p156
      %s159 = sadd.s32 %s158, 1
      %p162 = scmp.eq.s32.totalorder %s19, 1
      %p163 = scmp.ne.s32.totalorder %s158, %s160
      %p164 = scmp.eq.s32.totalorder %s19, 0
      %p165 = por %p163, %p164
      %p166 = scmp.ne.s32.totalorder %s158, %s160
      %p167 = scmp.eq.s32.totalorder %s24, 1
      %p168 = por %p166, %p167
      %p169 = scmp.ne.s32.totalorder %s160, %s161
      %p170 = scmp.eq.s32.totalorder %s24, 0
      %p171 = por %p169, %p170
      %p172 = scmp.ne.s32.totalorder %s160, %s161
      %p173 = scmp.eq.s32.totalorder %s25, 1
      %p174 = por %p172, %p173
      %p176 = scmp.ne.s32.totalorder %s161, %s175
      %p177 = scmp.eq.s32.totalorder %s25, 0
      %p178 = por %p176, %p177
      %s179 = ssub.s32 %s19, %s26
      %p180 = scmp.eq.s32.totalorder %s179, 0
      %s182 = sadd.s32 %s181, 1
      %s183 = scalar_select %p180, %s181, %s182
      %p186 = pneg %p180
      %p187 = scmp.eq.s32.totalorder %s19, 1
      %p188 = por %p186, %p187
      %p189 = scmp.ne.s32.totalorder %s181, %s184
      %p190 = scmp.eq.s32.totalorder %s19, 0
      %p191 = por %p189, %p190
      %p192 = scmp.ne.s32.totalorder %s181, %s184
      %p193 = scmp.eq.s32.totalorder %s24, 1
      %p194 = por %p192, %p193
      %p195 = scmp.ne.s32.totalorder %s184, %s185
      %p196 = scmp.eq.s32.totalorder %s24, 0
      %p197 = por %p195, %p196
      %p198 = scmp.ne.s32.totalorder %s184, %s185
      %p199 = scmp.eq.s32.totalorder %s25, 1
      %p200 = por %p198, %p199
      %p202 = scmp.ne.s32.totalorder %s185, %s201
      %p203 = scmp.eq.s32.totalorder %s25, 0
      %p204 = por %p202, %p203
      %p205 = scmp.le.s32.totalorder 1, %s19
      %p206 = scmp.lt.s32.totalorder %s19, 3
      %p207 = pnand %p205, %p206
      %p208 = pneg %p207
      // Predicated region
      $region9: #{tpu_custom_call.1} parent=5 // pred_check
        _
      $region10: #{tpu_custom_call.1} parent=5 // pred_check_branch
        %210 = sbr.rel (%p207) target = $region12
      $region11: #{tpu_custom_call.1} parent=5 // pred_region
        %s211 = ssub.s32 %s19, 1
        // Predicated region
        $region13: #{tpu_custom_call.1} parent=11 // pred_check
          %p212 = pneg %p66
        $region14: #{tpu_custom_call.1} parent=11 // pred_check_branch
          %214 = sbr.rel (%p212) target = $region16
        $region15: #{tpu_custom_call.1} parent=11 // pred_region
          _
        $region16: #{tpu_custom_call.1} parent=11 // pred_fallthru
          _
        // Predicated region
        $region17: #{tpu_custom_call.1} parent=11 // pred_check
          %p215 = pneg %p87
        $region18: #{tpu_custom_call.1} parent=11 // pred_check_branch
          %217 = sbr.rel (%p215) target = $region20
        $region19: #{tpu_custom_call.1} parent=11 // pred_region
          _
        $region20: #{tpu_custom_call.1} parent=11 // pred_fallthru
          _
        // Predicated region
        $region21: #{tpu_custom_call.1} parent=11 // pred_check
          %p218 = pneg %p108
        $region22: #{tpu_custom_call.1} parent=11 // pred_check_branch
          %220 = sbr.rel (%p218) target = $region24
        $region23: #{tpu_custom_call.1} parent=11 // pred_region
          _
        $region24: #{tpu_custom_call.1} parent=11 // pred_fallthru
          _
        // Predicated region
        $region25: #{tpu_custom_call.1} parent=11 // pred_check
          %p221 = pneg %p129
        $region26: #{tpu_custom_call.1} parent=11 // pred_check_branch
          %223 = sbr.rel (%p221) target = $region28
        $region27: #{tpu_custom_call.1} parent=11 // pred_region
          _
        $region28: #{tpu_custom_call.1} parent=11 // pred_fallthru
          _
        // Predicated region
        $region29: #{tpu_custom_call.1} parent=11 // pred_check
          %p224 = pneg %p150
        $region30: #{tpu_custom_call.1} parent=11 // pred_check_branch
          %226 = sbr.rel (%p224) target = $region32
        $region31: #{tpu_custom_call.1} parent=11 // pred_region
          _
        $region32: #{tpu_custom_call.1} parent=11 // pred_fallthru
          _
        // Predicated region
        $region33: #{tpu_custom_call.1} parent=11 // pred_check
          %p227 = pneg %p171
        $region34: #{tpu_custom_call.1} parent=11 // pred_check_branch
          %229 = sbr.rel (%p227) target = $region36
        $region35: #{tpu_custom_call.1} parent=11 // pred_region
          _
        $region36: #{tpu_custom_call.1} parent=11 // pred_fallthru
          _
      $region12: #{tpu_custom_call.1} parent=5 // pred_fallthru
        _
      %p230 = scmp.lt.s32.totalorder %s19, 2
      // Predicated region
      $region37: #{tpu_custom_call.1} parent=5 // pred_check
        %p231 = pneg %p230
      $region38: #{tpu_custom_call.1} parent=5 // pred_check_branch
        %233 = sbr.rel (%p231) target = $region40
      $region39: #{tpu_custom_call.1} parent=5 // pred_region
        // Predicated region
        $region41: #{tpu_custom_call.1} parent=39 // pred_check
          %p234 = pneg %p39
        $region42: #{tpu_custom_call.1} parent=39 // pred_check_branch
          %236 = sbr.rel (%p234) target = $region44
        $region43: #{tpu_custom_call.1} parent=39 // pred_region
          %s237 = sand.u32 %s29, 1
          %s238 = scalar_lea.sflag [#allocation4], %s237
          %s239 = sand.u32 %s29, 1
          %s240 = smul.addr %s239, 40
          %s241 = scalar_lea.vmem [#allocation3], %s240
          %s243 = ssub.s32 640, 640
          %244 = vsyncadd %s238, %s243
          %s245 = smul.addr %s19, 5
          %s246 = smul.addr %s245, 128
          %s247 = scalar_lea.hbm %s0, %s246
          %s249 = sshll.u32 %s241, 4
          %s250 = int_to_ptr.vmem [resolvable:$true] %s249
          %252 = dma.hbm_to_vmem [thread:$0]  %s247, 640, %s250, %s238
        $region44: #{tpu_custom_call.1} parent=39 // pred_fallthru
          _
      $region40: #{tpu_custom_call.1} parent=5 // pred_fallthru
        _
      %p253 = scmp.le.s32.totalorder 1, %s19
      %p254 = scmp.lt.s32.totalorder %s19, 3
      %p255 = pnand %p253, %p254
      %p256 = pneg %p255
      // Predicated region
      $region45: #{tpu_custom_call.1} parent=5 // pred_check
        _
      $region46: #{tpu_custom_call.1} parent=5 // pred_check_branch
        %258 = sbr.rel (%p255) target = $region48
      $region47: #{tpu_custom_call.1} parent=5 // pred_region
        %s259 = ssub.s32 %s19, 1
        %s260 = sand.u32 %s32, 1
        %s261 = scalar_lea.sflag [#allocation4], %s260
        %s262 = sand.u32 %s32, 1
        %s263 = smul.addr %s262, 40
        %s264 = scalar_lea.vmem [#allocation3], %s263
        // Predicated region
        $region49: #{tpu_custom_call.1} parent=47 // pred_check
          %p265 = pneg %p45
        $region50: #{tpu_custom_call.1} parent=47 // pred_check_branch
          %267 = sbr.rel (%p265) target = $region52
        $region51: #{tpu_custom_call.1} parent=47 // pred_region
          %268 = dma.done %s261, 640
        $region52: #{tpu_custom_call.1} parent=47 // pred_fallthru
          _
        %s269 = sand.u32 %s32, 1
        %s270 = scalar_lea.sflag [#allocation4], %s269
        %s271 = sand.u32 %s32, 1
        %s272 = smul.addr %s271, 40
        %s273 = scalar_lea.vmem [#allocation3], %s272
        %p274 = pneg %p45
        %p275 = pneg %p42
        %p276 = pneg %p66
        %p277 = pneg %p63
        %p278 = pneg %p87
        %p279 = pneg %p84
        %p280 = pneg %p108
        %p281 = pneg %p105
        %p282 = pneg %p129
        %p283 = pneg %p126
        %p284 = pneg %p150
        %p285 = pneg %p147
        %p286 = pneg %p171
        %p287 = pneg %p168
        %p288 = pneg %p197
        %p289 = pneg %p194
        %s290 = sand.u32 %s184, 1
        %s291 = scalar_lea.sflag [#allocation5], %s290
        %s292 = sand.u32 %s184, 1
        %s293 = smul.addr %s292, 40
        %s294 = scalar_lea.vmem [#allocation6], %s293
        %v295 = vld [vmem:[%s264] sm:$0xff]
        %v296 = vld [vmem:[%s264 + $0x8] sm:$0xff]
        %v297 = vld [vmem:[%s264 + $0x10] sm:$0xff]
        %v298 = vld [vmem:[%s264 + $0x18] sm:$0xff]
        %v299 = vld [vmem:[%s264 + $0x20] sm:$0xff]
        %301 = vrot.lane.b32.xlu0 %v299, 111
        %v302 = vpop.permute.xlu0 %301
        %308 = vrot.lane.b32.xlu0 %v295, 111
        %v309 = vpop.permute.xlu0 %308
        %310 = vrot.lane.b32.xlu0 %v296, 111
        %v311 = vpop.permute.xlu0 %310
        %312 = vrot.lane.b32.xlu0 %v297, 111
        %v313 = vpop.permute.xlu0 %312
        %314 = vrot.lane.b32.xlu0 %v298, 111
        %v315 = vpop.permute.xlu0 %314
        %vm316 = vcmask 908288
        %v317 = vsel %vm316, %v309, %v311
        %v318 = vsel %vm316, %v311, %v313
        %v319 = vsel %vm316, %v313, %v315
        %v320 = vsel %vm316, %v315, %v302
        %v326 = vsel %vm316, %v302, %v309
        %327 = vst [vmem:[#allocation2] sm:$0xff] %v326
        %328 = vst [vmem:[#allocation2 + $0x8] sm:$0xff] %v317
        %329 = vst [vmem:[#allocation2 + $0x10] sm:$0xff] %v318
        %330 = vst [vmem:[#allocation2 + $0x18] sm:$0xff] %v319
        %331 = vst [vmem:[#allocation2 + $0x20] sm:$0xff] %v320
        %332 = vrot.lane.b32.xlu0 %v299, 110
        %v333 = vpop.permute.xlu0 %332
        %335 = vrot.lane.b32.xlu0 %v295, 110
        %v336 = vpop.permute.xlu0 %335
        %337 = vrot.lane.b32.xlu0 %v296, 110
        %v338 = vpop.permute.xlu0 %337
        %339 = vrot.lane.b32.xlu0 %v297, 110
        %v340 = vpop.permute.xlu0 %339
        %341 = vrot.lane.b32.xlu0 %v298, 110
        %v342 = vpop.permute.xlu0 %341
        %vm343 = vcmask 900096
        %v344 = vsel %vm343, %v336, %v338
        %v345 = vsel %vm343, %v338, %v340
        %v346 = vsel %vm343, %v340, %v342
        %v347 = vsel %vm343, %v342, %v333
        %v353 = vsel %vm343, %v333, %v336
        %354 = vst [vmem:[#allocation2 + $0x28] sm:$0xff] %v353
        %355 = vst [vmem:[#allocation2 + $0x30] sm:$0xff] %v344
        %356 = vst [vmem:[#allocation2 + $0x38] sm:$0xff] %v345
        %357 = vst [vmem:[#allocation2 + $0x40] sm:$0xff] %v346
        %358 = vst [vmem:[#allocation2 + $0x48] sm:$0xff] %v347
        %359 = vrot.lane.b32.xlu0 %v299, 109
        %v360 = vpop.permute.xlu0 %359
        %362 = vrot.lane.b32.xlu0 %v295, 109
        %v363 = vpop.permute.xlu0 %362
        %364 = vrot.lane.b32.xlu0 %v296, 109
        %v365 = vpop.permute.xlu0 %364
        %366 = vrot.lane.b32.xlu0 %v297, 109
        %v367 = vpop.permute.xlu0 %366
        %368 = vrot.lane.b32.xlu0 %v298, 109
        %v369 = vpop.permute.xlu0 %368
        %vm370 = vcmask 891904
        %v371 = vsel %vm370, %v363, %v365
        %v372 = vsel %vm370, %v365, %v367
        %v373 = vsel %vm370, %v367, %v369
        %v374 = vsel %vm370, %v369, %v360
        %v380 = vsel %vm370, %v360, %v363
        %381 = vst [vmem:[#allocation2 + $0x50] sm:$0xff] %v380
        %382 = vst [vmem:[#allocation2 + $0x58] sm:$0xff] %v371
        %383 = vst [vmem:[#allocation2 + $0x60] sm:$0xff] %v372
        %384 = vst [vmem:[#allocation2 + $0x68] sm:$0xff] %v373
        %385 = vst [vmem:[#allocation2 + $0x70] sm:$0xff] %v374
        %386 = vrot.lane.b32.xlu0 %v299, 101
        %v387 = vpop.permute.xlu0 %386
        %389 = vrot.lane.b32.xlu0 %v295, 101
        %v390 = vpop.permute.xlu0 %389
        %391 = vrot.lane.b32.xlu0 %v296, 101
        %v392 = vpop.permute.xlu0 %391
        %393 = vrot.lane.b32.xlu0 %v297, 101
        %v394 = vpop.permute.xlu0 %393
        %395 = vrot.lane.b32.xlu0 %v298, 101
        %v396 = vpop.permute.xlu0 %395
        %vm397 = vcmask 826368
        %v398 = vsel %vm397, %v390, %v392
        %v399 = vsel %vm397, %v392, %v394
        %v400 = vsel %vm397, %v394, %v396
        %v401 = vsel %vm397, %v396, %v387
        %v407 = vsel %vm397, %v387, %v390
        %408 = vst [vmem:[#allocation2 + $0x78] sm:$0xff] %v407
        %409 = vst [vmem:[#allocation2 + $0x80] sm:$0xff] %v398
        %410 = vst [vmem:[#allocation2 + $0x88] sm:$0xff] %v399
        %411 = vst [vmem:[#allocation2 + $0x90] sm:$0xff] %v400
        %412 = vst [vmem:[#allocation2 + $0x98] sm:$0xff] %v401
        %413 = vrot.lane.b32.xlu0 %v299, 100
        %v414 = vpop.permute.xlu0 %413
        %416 = vrot.lane.b32.xlu0 %v295, 100
        %v417 = vpop.permute.xlu0 %416
        %418 = vrot.lane.b32.xlu0 %v296, 100
        %v419 = vpop.permute.xlu0 %418
        %420 = vrot.lane.b32.xlu0 %v297, 100
        %v421 = vpop.permute.xlu0 %420
        %422 = vrot.lane.b32.xlu0 %v298, 100
        %v423 = vpop.permute.xlu0 %422
        %vm424 = vcmask 818176
        %v425 = vsel %vm424, %v417, %v419
        %v426 = vsel %vm424, %v419, %v421
        %v427 = vsel %vm424, %v421, %v423
        %v428 = vsel %vm424, %v423, %v414
        %v434 = vsel %vm424, %v414, %v417
        %435 = vst [vmem:[#allocation2 + $0xa0] sm:$0xff] %v434
        %436 = vst [vmem:[#allocation2 + $0xa8] sm:$0xff] %v425
        %437 = vst [vmem:[#allocation2 + $0xb0] sm:$0xff] %v426
        %438 = vst [vmem:[#allocation2 + $0xb8] sm:$0xff] %v427
        %439 = vst [vmem:[#allocation2 + $0xc0] sm:$0xff] %v428
        %440 = vrot.lane.b32.xlu0 %v299, 99
        %v441 = vpop.permute.xlu0 %440
        %443 = vrot.lane.b32.xlu0 %v295, 99
        %v444 = vpop.permute.xlu0 %443
        %445 = vrot.lane.b32.xlu0 %v296, 99
        %v446 = vpop.permute.xlu0 %445
        %447 = vrot.lane.b32.xlu0 %v297, 99
        %v448 = vpop.permute.xlu0 %447
        %449 = vrot.lane.b32.xlu0 %v298, 99
        %v450 = vpop.permute.xlu0 %449
        %vm451 = vcmask 809984
        %v452 = vsel %vm451, %v444, %v446
        %v453 = vsel %vm451, %v446, %v448
        %v454 = vsel %vm451, %v448, %v450
        %v455 = vsel %vm451, %v450, %v441
        %v461 = vsel %vm451, %v441, %v444
        %462 = vst [vmem:[#allocation2 + $0xc8] sm:$0xff] %v461
        %463 = vst [vmem:[#allocation2 + $0xd0] sm:$0xff] %v452
        %464 = vst [vmem:[#allocation2 + $0xd8] sm:$0xff] %v453
        %465 = vst [vmem:[#allocation2 + $0xe0] sm:$0xff] %v454
        %466 = vst [vmem:[#allocation2 + $0xe8] sm:$0xff] %v455
        %467 = vrot.lane.b32.xlu0 %v299, 91
        %v468 = vpop.permute.xlu0 %467
        %470 = vrot.lane.b32.xlu0 %v295, 91
        %v471 = vpop.permute.xlu0 %470
        %472 = vrot.lane.b32.xlu0 %v296, 91
        %v473 = vpop.permute.xlu0 %472
        %474 = vrot.lane.b32.xlu0 %v297, 91
        %v475 = vpop.permute.xlu0 %474
        %476 = vrot.lane.b32.xlu0 %v298, 91
        %v477 = vpop.permute.xlu0 %476
        %vm478 = vcmask 744448
        %v479 = vsel %vm478, %v471, %v473
        %v480 = vsel %vm478, %v473, %v475
        %v481 = vsel %vm478, %v475, %v477
        %v482 = vsel %vm478, %v477, %v468
        %v488 = vsel %vm478, %v468, %v471
        %489 = vst [vmem:[#allocation2 + $0xf0] sm:$0xff] %v488
        %490 = vst [vmem:[#allocation2 + $0xf8] sm:$0xff] %v479
        %491 = vst [vmem:[#allocation2 + $0x100] sm:$0xff] %v480
        %492 = vst [vmem:[#allocation2 + $0x108] sm:$0xff] %v481
        %493 = vst [vmem:[#allocation2 + $0x110] sm:$0xff] %v482
        %494 = vrot.lane.b32.xlu0 %v299, 90
        %v495 = vpop.permute.xlu0 %494
        %497 = vrot.lane.b32.xlu0 %v295, 90
        %v498 = vpop.permute.xlu0 %497
        %499 = vrot.lane.b32.xlu0 %v296, 90
        %v500 = vpop.permute.xlu0 %499
        %501 = vrot.lane.b32.xlu0 %v297, 90
        %v502 = vpop.permute.xlu0 %501
        %503 = vrot.lane.b32.xlu0 %v298, 90
        %v504 = vpop.permute.xlu0 %503
        %vm505 = vcmask 736256
        %v506 = vsel %vm505, %v498, %v500
        %v507 = vsel %vm505, %v500, %v502
        %v508 = vsel %vm505, %v502, %v504
        %v509 = vsel %vm505, %v504, %v495
        %v515 = vsel %vm505, %v495, %v498
        %516 = vst [vmem:[#allocation2 + $0x118] sm:$0xff] %v515
        %517 = vst [vmem:[#allocation2 + $0x120] sm:$0xff] %v506
        %518 = vst [vmem:[#allocation2 + $0x128] sm:$0xff] %v507
        %519 = vst [vmem:[#allocation2 + $0x130] sm:$0xff] %v508
        %520 = vst [vmem:[#allocation2 + $0x138] sm:$0xff] %v509
        %521 = vrot.lane.b32.xlu0 %v299, 89
        %v522 = vpop.permute.xlu0 %521
        %524 = vrot.lane.b32.xlu0 %v295, 89
        %v525 = vpop.permute.xlu0 %524
        %526 = vrot.lane.b32.xlu0 %v296, 89
        %v527 = vpop.permute.xlu0 %526
        %528 = vrot.lane.b32.xlu0 %v297, 89
        %v529 = vpop.permute.xlu0 %528
        %530 = vrot.lane.b32.xlu0 %v298, 89
        %v531 = vpop.permute.xlu0 %530
        %vm532 = vcmask 728064
        %v533 = vsel %vm532, %v525, %v527
        %v534 = vsel %vm532, %v527, %v529
        %v535 = vsel %vm532, %v529, %v531
        %v536 = vsel %vm532, %v531, %v522
        %v542 = vsel %vm532, %v522, %v525
        %543 = vst [vmem:[#allocation2 + $0x140] sm:$0xff] %v542
        %544 = vst [vmem:[#allocation2 + $0x148] sm:$0xff] %v533
        %545 = vst [vmem:[#allocation2 + $0x150] sm:$0xff] %v534
        %546 = vst [vmem:[#allocation2 + $0x158] sm:$0xff] %v535
        %547 = vst [vmem:[#allocation2 + $0x160] sm:$0xff] %v536
        %548 = vrot.lane.b32.xlu0 %v299, 11
        %v549 = vpop.permute.xlu0 %548
        %551 = vrot.lane.b32.xlu0 %v295, 11
        %v552 = vpop.permute.xlu0 %551
        %553 = vrot.lane.b32.xlu0 %v296, 11
        %v554 = vpop.permute.xlu0 %553
        %555 = vrot.lane.b32.xlu0 %v297, 11
        %v556 = vpop.permute.xlu0 %555
        %557 = vrot.lane.b32.xlu0 %v298, 11
        %v558 = vpop.permute.xlu0 %557
        %vm559 = vcmask 89088
        %v560 = vsel %vm559, %v552, %v554
        %v561 = vsel %vm559, %v554, %v556
        %v562 = vsel %vm559, %v556, %v558
        %v563 = vsel %vm559, %v558, %v549
        %v569 = vsel %vm559, %v549, %v552
        %570 = vst [vmem:[#allocation2 + $0x168] sm:$0xff] %v569
        %571 = vst [vmem:[#allocation2 + $0x170] sm:$0xff] %v560
        %572 = vst [vmem:[#allocation2 + $0x178] sm:$0xff] %v561
        %573 = vst [vmem:[#allocation2 + $0x180] sm:$0xff] %v562
        %574 = vst [vmem:[#allocation2 + $0x188] sm:$0xff] %v563
        %575 = vrot.lane.b32.xlu0 %v299, 10
        %v576 = vpop.permute.xlu0 %575
        %578 = vrot.lane.b32.xlu0 %v295, 10
        %v579 = vpop.permute.xlu0 %578
        %580 = vrot.lane.b32.xlu0 %v296, 10
        %v581 = vpop.permute.xlu0 %580
        %582 = vrot.lane.b32.xlu0 %v297, 10
        %v583 = vpop.permute.xlu0 %582
        %584 = vrot.lane.b32.xlu0 %v298, 10
        %v585 = vpop.permute.xlu0 %584
        %vm586 = vcmask 80896
        %v587 = vsel %vm586, %v579, %v581
        %v588 = vsel %vm586, %v581, %v583
        %v589 = vsel %vm586, %v583, %v585
        %v590 = vsel %vm586, %v585, %v576
        %v596 = vsel %vm586, %v576, %v579
        %597 = vst [vmem:[#allocation2 + $0x190] sm:$0xff] %v596
        %598 = vst [vmem:[#allocation2 + $0x198] sm:$0xff] %v587
        %599 = vst [vmem:[#allocation2 + $0x1a0] sm:$0xff] %v588
        %600 = vst [vmem:[#allocation2 + $0x1a8] sm:$0xff] %v589
        %601 = vst [vmem:[#allocation2 + $0x1b0] sm:$0xff] %v590
        %602 = vrot.lane.b32.xlu0 %v299, 9
        %v603 = vpop.permute.xlu0 %602
        %605 = vrot.lane.b32.xlu0 %v295, 9
        %v606 = vpop.permute.xlu0 %605
        %607 = vrot.lane.b32.xlu0 %v296, 9
        %v608 = vpop.permute.xlu0 %607
        %609 = vrot.lane.b32.xlu0 %v297, 9
        %v610 = vpop.permute.xlu0 %609
        %611 = vrot.lane.b32.xlu0 %v298, 9
        %v612 = vpop.permute.xlu0 %611
        %vm613 = vcmask 72704
        %v614 = vsel %vm613, %v606, %v608
        %v615 = vsel %vm613, %v608, %v610
        %v616 = vsel %vm613, %v610, %v612
        %v617 = vsel %vm613, %v612, %v603
        %v623 = vsel %vm613, %v603, %v606
        %624 = vst [vmem:[#allocation2 + $0x1b8] sm:$0xff] %v623
        %625 = vst [vmem:[#allocation2 + $0x1c0] sm:$0xff] %v614
        %626 = vst [vmem:[#allocation2 + $0x1c8] sm:$0xff] %v615
        %627 = vst [vmem:[#allocation2 + $0x1d0] sm:$0xff] %v616
        %628 = vst [vmem:[#allocation2 + $0x1d8] sm:$0xff] %v617
        %629 = vrot.lane.b32.xlu0 %v299, 1
        %v630 = vpop.permute.xlu0 %629
        %632 = vrot.lane.b32.xlu0 %v295, 1
        %v633 = vpop.permute.xlu0 %632
        %634 = vrot.lane.b32.xlu0 %v296, 1
        %v635 = vpop.permute.xlu0 %634
        %636 = vrot.lane.b32.xlu0 %v297, 1
        %v637 = vpop.permute.xlu0 %636
        %638 = vrot.lane.b32.xlu0 %v298, 1
        %v639 = vpop.permute.xlu0 %638
        %vm640 = vcmask 7168
        %v641 = vsel %vm640, %v633, %v635
        %v642 = vsel %vm640, %v635, %v637
        %v643 = vsel %vm640, %v637, %v639
        %v644 = vsel %vm640, %v639, %v630
        %v650 = vsel %vm640, %v630, %v633
        %651 = vst [vmem:[#allocation2 + $0x1e0] sm:$0xff] %v650
        %652 = vst [vmem:[#allocation2 + $0x1e8] sm:$0xff] %v641
        %653 = vst [vmem:[#allocation2 + $0x1f0] sm:$0xff] %v642
        %654 = vst [vmem:[#allocation2 + $0x1f8] sm:$0xff] %v643
        %655 = vst [vmem:[#allocation2 + $0x200] sm:$0xff] %v644
        %656 = vst [vmem:[#allocation2 + $0x208] sm:$0xff] %v295
        %657 = vst [vmem:[#allocation2 + $0x210] sm:$0xff] %v296
        %658 = vst [vmem:[#allocation2 + $0x218] sm:$0xff] %v297
        %659 = vst [vmem:[#allocation2 + $0x220] sm:$0xff] %v298
        %660 = vst [vmem:[#allocation2 + $0x228] sm:$0xff] %v299
        %661 = vrot.lane.b32.xlu0 %v295, 127
        %v662 = vpop.permute.xlu0 %661
        %663 = vrot.lane.b32.xlu0 %v296, 127
        %v664 = vpop.permute.xlu0 %663
        %665 = vrot.lane.b32.xlu0 %v297, 127
        %v666 = vpop.permute.xlu0 %665
        %667 = vrot.lane.b32.xlu0 %v298, 127
        %v668 = vpop.permute.xlu0 %667
        %669 = vrot.lane.b32.xlu0 %v299, 127
        %v670 = vpop.permute.xlu0 %669
        %vm671 = vcmask 1039360
        %v672 = vsel %vm671, %v662, %v664
        %v673 = vsel %vm671, %v664, %v666
        %v674 = vsel %vm671, %v666, %v668
        %v675 = vsel %vm671, %v668, %v670
        %v682 = vsel %vm671, %v670, %v662
        %683 = vst [vmem:[#allocation2 + $0x230] sm:$0xff] %v672
        %684 = vst [vmem:[#allocation2 + $0x238] sm:$0xff] %v673
        %685 = vst [vmem:[#allocation2 + $0x240] sm:$0xff] %v674
        %686 = vst [vmem:[#allocation2 + $0x248] sm:$0xff] %v675
        %687 = vst [vmem:[#allocation2 + $0x250] sm:$0xff] %v682
        %688 = vrot.lane.b32.xlu0 %v295, 119
        %v689 = vpop.permute.xlu0 %688
        %690 = vrot.lane.b32.xlu0 %v296, 119
        %v691 = vpop.permute.xlu0 %690
        %692 = vrot.lane.b32.xlu0 %v297, 119
        %v693 = vpop.permute.xlu0 %692
        %694 = vrot.lane.b32.xlu0 %v298, 119
        %v695 = vpop.permute.xlu0 %694
        %696 = vrot.lane.b32.xlu0 %v299, 119
        %v697 = vpop.permute.xlu0 %696
        %vm698 = vcmask 973824
        %v699 = vsel %vm698, %v689, %v691
        %v700 = vsel %vm698, %v691, %v693
        %v701 = vsel %vm698, %v693, %v695
        %v702 = vsel %vm698, %v695, %v697
        %v709 = vsel %vm698, %v697, %v689
        %710 = vst [vmem:[#allocation2 + $0x258] sm:$0xff] %v699
        %711 = vst [vmem:[#allocation2 + $0x260] sm:$0xff] %v700
        %712 = vst [vmem:[#allocation2 + $0x268] sm:$0xff] %v701
        %713 = vst [vmem:[#allocation2 + $0x270] sm:$0xff] %v702
        %714 = vst [vmem:[#allocation2 + $0x278] sm:$0xff] %v709
        %715 = vrot.lane.b32.xlu0 %v295, 118
        %v716 = vpop.permute.xlu0 %715
        %717 = vrot.lane.b32.xlu0 %v296, 118
        %v718 = vpop.permute.xlu0 %717
        %719 = vrot.lane.b32.xlu0 %v297, 118
        %v720 = vpop.permute.xlu0 %719
        %721 = vrot.lane.b32.xlu0 %v298, 118
        %v722 = vpop.permute.xlu0 %721
        %723 = vrot.lane.b32.xlu0 %v299, 118
        %v724 = vpop.permute.xlu0 %723
        %vm725 = vcmask 965632
        %v726 = vsel %vm725, %v716, %v718
        %v727 = vsel %vm725, %v718, %v720
        %v728 = vsel %vm725, %v720, %v722
        %v729 = vsel %vm725, %v722, %v724
        %v736 = vsel %vm725, %v724, %v716
        %737 = vst [vmem:[#allocation2 + $0x280] sm:$0xff] %v726
        %738 = vst [vmem:[#allocation2 + $0x288] sm:$0xff] %v727
        %739 = vst [vmem:[#allocation2 + $0x290] sm:$0xff] %v728
        %740 = vst [vmem:[#allocation2 + $0x298] sm:$0xff] %v729
        %741 = vst [vmem:[#allocation2 + $0x2a0] sm:$0xff] %v736
        %742 = vrot.lane.b32.xlu0 %v295, 117
        %v743 = vpop.permute.xlu0 %742
        %744 = vrot.lane.b32.xlu0 %v296, 117
        %v745 = vpop.permute.xlu0 %744
        %746 = vrot.lane.b32.xlu0 %v297, 117
        %v747 = vpop.permute.xlu0 %746
        %748 = vrot.lane.b32.xlu0 %v298, 117
        %v749 = vpop.permute.xlu0 %748
        %750 = vrot.lane.b32.xlu0 %v299, 117
        %v751 = vpop.permute.xlu0 %750
        %vm752 = vcmask 957440
        %v753 = vsel %vm752, %v743, %v745
        %v754 = vsel %vm752, %v745, %v747
        %v755 = vsel %vm752, %v747, %v749
        %v756 = vsel %vm752, %v749, %v751
        %v763 = vsel %vm752, %v751, %v743
        %764 = vst [vmem:[#allocation2 + $0x2a8] sm:$0xff] %v753
        %765 = vst [vmem:[#allocation2 + $0x2b0] sm:$0xff] %v754
        %766 = vst [vmem:[#allocation2 + $0x2b8] sm:$0xff] %v755
        %767 = vst [vmem:[#allocation2 + $0x2c0] sm:$0xff] %v756
        %768 = vst [vmem:[#allocation2 + $0x2c8] sm:$0xff] %v763
        %769 = vrot.lane.b32.xlu0 %v295, 39
        %v770 = vpop.permute.xlu0 %769
        %771 = vrot.lane.b32.xlu0 %v296, 39
        %v772 = vpop.permute.xlu0 %771
        %773 = vrot.lane.b32.xlu0 %v297, 39
        %v774 = vpop.permute.xlu0 %773
        %775 = vrot.lane.b32.xlu0 %v298, 39
        %v776 = vpop.permute.xlu0 %775
        %777 = vrot.lane.b32.xlu0 %v299, 39
        %v778 = vpop.permute.xlu0 %777
        %vm779 = vcmask 318464
        %v780 = vsel %vm779, %v770, %v772
        %v781 = vsel %vm779, %v772, %v774
        %v782 = vsel %vm779, %v774, %v776
        %v783 = vsel %vm779, %v776, %v778
        %v790 = vsel %vm779, %v778, %v770
        %791 = vst [vmem:[#allocation2 + $0x2d0] sm:$0xff] %v780
        %792 = vst [vmem:[#allocation2 + $0x2d8] sm:$0xff] %v781
        %793 = vst [vmem:[#allocation2 + $0x2e0] sm:$0xff] %v782
        %794 = vst [vmem:[#allocation2 + $0x2e8] sm:$0xff] %v783
        %795 = vst [vmem:[#allocation2 + $0x2f0] sm:$0xff] %v790
        %796 = vrot.lane.b32.xlu0 %v295, 38
        %v797 = vpop.permute.xlu0 %796
        %798 = vrot.lane.b32.xlu0 %v296, 38
        %v799 = vpop.permute.xlu0 %798
        %800 = vrot.lane.b32.xlu0 %v297, 38
        %v801 = vpop.permute.xlu0 %800
        %802 = vrot.lane.b32.xlu0 %v298, 38
        %v803 = vpop.permute.xlu0 %802
        %804 = vrot.lane.b32.xlu0 %v299, 38
        %v805 = vpop.permute.xlu0 %804
        %vm806 = vcmask 310272
        %v807 = vsel %vm806, %v797, %v799
        %v808 = vsel %vm806, %v799, %v801
        %v809 = vsel %vm806, %v801, %v803
        %v810 = vsel %vm806, %v803, %v805
        %v817 = vsel %vm806, %v805, %v797
        %818 = vst [vmem:[#allocation2 + $0x2f8] sm:$0xff] %v807
        %819 = vst [vmem:[#allocation2 + $0x300] sm:$0xff] %v808
        %820 = vst [vmem:[#allocation2 + $0x308] sm:$0xff] %v809
        %821 = vst [vmem:[#allocation2 + $0x310] sm:$0xff] %v810
        %822 = vst [vmem:[#allocation2 + $0x318] sm:$0xff] %v817
        %823 = vrot.lane.b32.xlu0 %v295, 37
        %v824 = vpop.permute.xlu0 %823
        %825 = vrot.lane.b32.xlu0 %v296, 37
        %v826 = vpop.permute.xlu0 %825
        %827 = vrot.lane.b32.xlu0 %v297, 37
        %v828 = vpop.permute.xlu0 %827
        %829 = vrot.lane.b32.xlu0 %v298, 37
        %v830 = vpop.permute.xlu0 %829
        %831 = vrot.lane.b32.xlu0 %v299, 37
        %v832 = vpop.permute.xlu0 %831
        %vm833 = vcmask 302080
        %v834 = vsel %vm833, %v824, %v826
        %v835 = vsel %vm833, %v826, %v828
        %v836 = vsel %vm833, %v828, %v830
        %v837 = vsel %vm833, %v830, %v832
        %v844 = vsel %vm833, %v832, %v824
        %845 = vst [vmem:[#allocation2 + $0x320] sm:$0xff] %v834
        %846 = vst [vmem:[#allocation2 + $0x328] sm:$0xff] %v835
        %847 = vst [vmem:[#allocation2 + $0x330] sm:$0xff] %v836
        %848 = vst [vmem:[#allocation2 + $0x338] sm:$0xff] %v837
        %849 = vst [vmem:[#allocation2 + $0x340] sm:$0xff] %v844
        %850 = vrot.lane.b32.xlu0 %v295, 29
        %v851 = vpop.permute.xlu0 %850
        %852 = vrot.lane.b32.xlu0 %v296, 29
        %v853 = vpop.permute.xlu0 %852
        %854 = vrot.lane.b32.xlu0 %v297, 29
        %v855 = vpop.permute.xlu0 %854
        %856 = vrot.lane.b32.xlu0 %v298, 29
        %v857 = vpop.permute.xlu0 %856
        %858 = vrot.lane.b32.xlu0 %v299, 29
        %v859 = vpop.permute.xlu0 %858
        %vm860 = vcmask 236544
        %v861 = vsel %vm860, %v851, %v853
        %v862 = vsel %vm860, %v853, %v855
        %v863 = vsel %vm860, %v855, %v857
        %v864 = vsel %vm860, %v857, %v859
        %v871 = vsel %vm860, %v859, %v851
        %872 = vst [vmem:[#allocation2 + $0x348] sm:$0xff] %v861
        %873 = vst [vmem:[#allocation2 + $0x350] sm:$0xff] %v862
        %874 = vst [vmem:[#allocation2 + $0x358] sm:$0xff] %v863
        %875 = vst [vmem:[#allocation2 + $0x360] sm:$0xff] %v864
        %876 = vst [vmem:[#allocation2 + $0x368] sm:$0xff] %v871
        %877 = vrot.lane.b32.xlu0 %v295, 28
        %v878 = vpop.permute.xlu0 %877
        %879 = vrot.lane.b32.xlu0 %v296, 28
        %v880 = vpop.permute.xlu0 %879
        %881 = vrot.lane.b32.xlu0 %v297, 28
        %v882 = vpop.permute.xlu0 %881
        %883 = vrot.lane.b32.xlu0 %v298, 28
        %v884 = vpop.permute.xlu0 %883
        %885 = vrot.lane.b32.xlu0 %v299, 28
        %v886 = vpop.permute.xlu0 %885
        %vm887 = vcmask 228352
        %v888 = vsel %vm887, %v878, %v880
        %v889 = vsel %vm887, %v880, %v882
        %v890 = vsel %vm887, %v882, %v884
        %v891 = vsel %vm887, %v884, %v886
        %v898 = vsel %vm887, %v886, %v878
        %899 = vst [vmem:[#allocation2 + $0x370] sm:$0xff] %v888
        %900 = vst [vmem:[#allocation2 + $0x378] sm:$0xff] %v889
        %901 = vst [vmem:[#allocation2 + $0x380] sm:$0xff] %v890
        %902 = vst [vmem:[#allocation2 + $0x388] sm:$0xff] %v891
        %903 = vst [vmem:[#allocation2 + $0x390] sm:$0xff] %v898
        %904 = vrot.lane.b32.xlu0 %v295, 27
        %v905 = vpop.permute.xlu0 %904
        %906 = vrot.lane.b32.xlu0 %v296, 27
        %v907 = vpop.permute.xlu0 %906
        %908 = vrot.lane.b32.xlu0 %v297, 27
        %v909 = vpop.permute.xlu0 %908
        %910 = vrot.lane.b32.xlu0 %v298, 27
        %v911 = vpop.permute.xlu0 %910
        %912 = vrot.lane.b32.xlu0 %v299, 27
        %v913 = vpop.permute.xlu0 %912
        %vm914 = vcmask 220160
        %v915 = vsel %vm914, %v905, %v907
        %v916 = vsel %vm914, %v907, %v909
        %v917 = vsel %vm914, %v909, %v911
        %v918 = vsel %vm914, %v911, %v913
        %v925 = vsel %vm914, %v913, %v905
        %926 = vst [vmem:[#allocation2 + $0x398] sm:$0xff] %v915
        %927 = vst [vmem:[#allocation2 + $0x3a0] sm:$0xff] %v916
        %928 = vst [vmem:[#allocation2 + $0x3a8] sm:$0xff] %v917
        %929 = vst [vmem:[#allocation2 + $0x3b0] sm:$0xff] %v918
        %930 = vst [vmem:[#allocation2 + $0x3b8] sm:$0xff] %v925
        %931 = vrot.lane.b32.xlu0 %v295, 19
        %v932 = vpop.permute.xlu0 %931
        %933 = vrot.lane.b32.xlu0 %v296, 19
        %v934 = vpop.permute.xlu0 %933
        %935 = vrot.lane.b32.xlu0 %v297, 19
        %v936 = vpop.permute.xlu0 %935
        %937 = vrot.lane.b32.xlu0 %v298, 19
        %v938 = vpop.permute.xlu0 %937
        %939 = vrot.lane.b32.xlu0 %v299, 19
        %v940 = vpop.permute.xlu0 %939
        %vm941 = vcmask 154624
        %v942 = vsel %vm941, %v932, %v934
        %v943 = vsel %vm941, %v934, %v936
        %v944 = vsel %vm941, %v936, %v938
        %v945 = vsel %vm941, %v938, %v940
        %v952 = vsel %vm941, %v940, %v932
        %953 = vst [vmem:[#allocation2 + $0x3c0] sm:$0xff] %v942
        %954 = vst [vmem:[#allocation2 + $0x3c8] sm:$0xff] %v943
        %955 = vst [vmem:[#allocation2 + $0x3d0] sm:$0xff] %v944
        %956 = vst [vmem:[#allocation2 + $0x3d8] sm:$0xff] %v945
        %957 = vst [vmem:[#allocation2 + $0x3e0] sm:$0xff] %v952
        %958 = vrot.lane.b32.xlu0 %v295, 18
        %v959 = vpop.permute.xlu0 %958
        %960 = vrot.lane.b32.xlu0 %v296, 18
        %v961 = vpop.permute.xlu0 %960
        %962 = vrot.lane.b32.xlu0 %v297, 18
        %v963 = vpop.permute.xlu0 %962
        %964 = vrot.lane.b32.xlu0 %v298, 18
        %v965 = vpop.permute.xlu0 %964
        %966 = vrot.lane.b32.xlu0 %v299, 18
        %v967 = vpop.permute.xlu0 %966
        %vm968 = vcmask 146432
        %v969 = vsel %vm968, %v959, %v961
        %v970 = vsel %vm968, %v961, %v963
        %v971 = vsel %vm968, %v963, %v965
        %v972 = vsel %vm968, %v965, %v967
        %v979 = vsel %vm968, %v967, %v959
        %980 = vst [vmem:[#allocation2 + $0x3e8] sm:$0xff] %v969
        %981 = vst [vmem:[#allocation2 + $0x3f0] sm:$0xff] %v970
        %982 = vst [vmem:[#allocation2 + $0x3f8] sm:$0xff] %v971
        %983 = vst [vmem:[#allocation2 + $0x400] sm:$0xff] %v972
        %984 = vst [vmem:[#allocation2 + $0x408] sm:$0xff] %v979
        %985 = vrot.lane.b32.xlu0 %v295, 17
        %v986 = vpop.permute.xlu0 %985
        %987 = vrot.lane.b32.xlu0 %v296, 17
        %v988 = vpop.permute.xlu0 %987
        %989 = vrot.lane.b32.xlu0 %v297, 17
        %v990 = vpop.permute.xlu0 %989
        %991 = vrot.lane.b32.xlu0 %v298, 17
        %v992 = vpop.permute.xlu0 %991
        %993 = vrot.lane.b32.xlu0 %v299, 17
        %v994 = vpop.permute.xlu0 %993
        %vm995 = vcmask 138240
        %v996 = vsel %vm995, %v986, %v988
        %v997 = vsel %vm995, %v988, %v990
        %v998 = vsel %vm995, %v990, %v992
        %v999 = vsel %vm995, %v992, %v994
        %v1006 = vsel %vm995, %v994, %v986
        %1007 = vst [vmem:[#allocation2 + $0x410] sm:$0xff] %v996
        %1008 = vst [vmem:[#allocation2 + $0x418] sm:$0xff] %v997
        %1009 = vst [vmem:[#allocation2 + $0x420] sm:$0xff] %v998
        %1010 = vst [vmem:[#allocation2 + $0x428] sm:$0xff] %v999
        %1011 = vst [vmem:[#allocation2 + $0x430] sm:$0xff] %v1006
        %v1012 = vld [vmem:[%s1] sm:$0xff]
        %v1013 = vld [vmem:[%s1 + $0x8] sm:$0xff]
        %v1014 = vld [vmem:[#allocation2] sm:$0xff]
        %v1015 = vld [vmem:[#allocation2 + $0x8] sm:$0xff]
        %v1016 = vld [vmem:[#allocation2 + $0x10] sm:$0xff]
        %v1017 = vld [vmem:[#allocation2 + $0x18] sm:$0xff]
        %v1018 = vld [vmem:[#allocation2 + $0x20] sm:$0xff]
        %v1019 = vld [vmem:[#allocation2 + $0x28] sm:$0xff]
        %v1020 = vld [vmem:[#allocation2 + $0x30] sm:$0xff]
        %v1021 = vld [vmem:[#allocation2 + $0x38] sm:$0xff]
        %v1022 = vld [vmem:[#allocation2 + $0x40] sm:$0xff]
        %v1023 = vld [vmem:[#allocation2 + $0x48] sm:$0xff]
        %v1024 = vld [vmem:[#allocation2 + $0x50] sm:$0xff]
        %v1025 = vld [vmem:[#allocation2 + $0x58] sm:$0xff]
        %v1026 = vld [vmem:[#allocation2 + $0x60] sm:$0xff]
        %v1027 = vld [vmem:[#allocation2 + $0x68] sm:$0xff]
        %v1028 = vld [vmem:[#allocation2 + $0x70] sm:$0xff]
        %v1029 = vld [vmem:[#allocation2 + $0x78] sm:$0xff]
        %v1030 = vld [vmem:[#allocation2 + $0x80] sm:$0xff]
        %v1031 = vld [vmem:[#allocation2 + $0x88] sm:$0xff]
        %v1032 = vld [vmem:[#allocation2 + $0x90] sm:$0xff]
        %v1033 = vld [vmem:[#allocation2 + $0x98] sm:$0xff]
        %v1034 = vld [vmem:[#allocation2 + $0xa0] sm:$0xff]
        %v1035 = vld [vmem:[#allocation2 + $0xa8] sm:$0xff]
        %v1036 = vld [vmem:[#allocation2 + $0xb0] sm:$0xff]
        %v1037 = vld [vmem:[#allocation2 + $0xb8] sm:$0xff]
        %v1038 = vld [vmem:[#allocation2 + $0xc0] sm:$0xff]
        %v1039 = vld [vmem:[#allocation2 + $0xc8] sm:$0xff]
        %v1040 = vld [vmem:[#allocation2 + $0xd0] sm:$0xff]
        %v1041 = vld [vmem:[#allocation2 + $0xd8] sm:$0xff]
        %v1042 = vld [vmem:[#allocation2 + $0xe0] sm:$0xff]
        %v1043 = vld [vmem:[#allocation2 + $0xe8] sm:$0xff]
        %v1044 = vld [vmem:[#allocation2 + $0xf0] sm:$0xff]
        %v1045 = vld [vmem:[#allocation2 + $0xf8] sm:$0xff]
        %v1046 = vld [vmem:[#allocation2 + $0x100] sm:$0xff]
        %v1047 = vld [vmem:[#allocation2 + $0x108] sm:$0xff]
        %v1048 = vld [vmem:[#allocation2 + $0x110] sm:$0xff]
        %v1049 = vld [vmem:[#allocation2 + $0x118] sm:$0xff]
        %v1050 = vld [vmem:[#allocation2 + $0x120] sm:$0xff]
        %v1051 = vld [vmem:[#allocation2 + $0x128] sm:$0xff]
        %v1052 = vld [vmem:[#allocation2 + $0x130] sm:$0xff]
        %v1053 = vld [vmem:[#allocation2 + $0x138] sm:$0xff]
        %v1054 = vld [vmem:[#allocation2 + $0x140] sm:$0xff]
        %v1055 = vld [vmem:[#allocation2 + $0x148] sm:$0xff]
        %v1056 = vld [vmem:[#allocation2 + $0x150] sm:$0xff]
        %v1057 = vld [vmem:[#allocation2 + $0x158] sm:$0xff]
        %v1058 = vld [vmem:[#allocation2 + $0x160] sm:$0xff]
        %v1059 = vld [vmem:[#allocation2 + $0x168] sm:$0xff]
        %v1060 = vld [vmem:[#allocation2 + $0x170] sm:$0xff]
        %v1061 = vld [vmem:[#allocation2 + $0x178] sm:$0xff]
        %v1062 = vld [vmem:[#allocation2 + $0x180] sm:$0xff]
        %v1063 = vld [vmem:[#allocation2 + $0x188] sm:$0xff]
        %v1064 = vld [vmem:[#allocation2 + $0x190] sm:$0xff]
        %v1065 = vld [vmem:[#allocation2 + $0x198] sm:$0xff]
        %v1066 = vld [vmem:[#allocation2 + $0x1a0] sm:$0xff]
        %v1067 = vld [vmem:[#allocation2 + $0x1a8] sm:$0xff]
        %v1068 = vld [vmem:[#allocation2 + $0x1b0] sm:$0xff]
        %v1069 = vld [vmem:[#allocation2 + $0x1b8] sm:$0xff]
        %v1070 = vld [vmem:[#allocation2 + $0x1c0] sm:$0xff]
        %v1071 = vld [vmem:[#allocation2 + $0x1c8] sm:$0xff]
        %v1072 = vld [vmem:[#allocation2 + $0x1d0] sm:$0xff]
        %v1073 = vld [vmem:[#allocation2 + $0x1d8] sm:$0xff]
        %v1074 = vld [vmem:[#allocation2 + $0x1e0] sm:$0xff]
        %v1075 = vld [vmem:[#allocation2 + $0x1e8] sm:$0xff]
        %v1076 = vld [vmem:[#allocation2 + $0x1f0] sm:$0xff]
        %v1077 = vld [vmem:[#allocation2 + $0x1f8] sm:$0xff]
        %v1078 = vld [vmem:[#allocation2 + $0x200] sm:$0xff]
        %v1079 = vld [vmem:[#allocation2 + $0x208] sm:$0xff]
        %v1080 = vld [vmem:[#allocation2 + $0x210] sm:$0xff]
        %v1081 = vld [vmem:[#allocation2 + $0x218] sm:$0xff]
        %v1082 = vld [vmem:[#allocation2 + $0x220] sm:$0xff]
        %v1083 = vld [vmem:[#allocation2 + $0x228] sm:$0xff]
        %v1084 = vld [vmem:[#allocation2 + $0x230] sm:$0xff]
        %v1085 = vld [vmem:[#allocation2 + $0x238] sm:$0xff]
        %v1086 = vld [vmem:[#allocation2 + $0x240] sm:$0xff]
        %v1087 = vld [vmem:[#allocation2 + $0x248] sm:$0xff]
        %v1088 = vld [vmem:[#allocation2 + $0x250] sm:$0xff]
        %v1089 = vld [vmem:[#allocation2 + $0x258] sm:$0xff]
        %v1090 = vld [vmem:[#allocation2 + $0x260] sm:$0xff]
        %v1091 = vld [vmem:[#allocation2 + $0x268] sm:$0xff]
        %v1092 = vld [vmem:[#allocation2 + $0x270] sm:$0xff]
        %v1093 = vld [vmem:[#allocation2 + $0x278] sm:$0xff]
        %v1094 = vld [vmem:[#allocation2 + $0x280] sm:$0xff]
        %v1095 = vld [vmem:[#allocation2 + $0x288] sm:$0xff]
        %v1096 = vld [vmem:[#allocation2 + $0x290] sm:$0xff]
        %v1097 = vld [vmem:[#allocation2 + $0x298] sm:$0xff]
        %v1098 = vld [vmem:[#allocation2 + $0x2a0] sm:$0xff]
        %v1099 = vld [vmem:[#allocation2 + $0x2a8] sm:$0xff]
        %v1100 = vld [vmem:[#allocation2 + $0x2b0] sm:$0xff]
        %v1101 = vld [vmem:[#allocation2 + $0x2b8] sm:$0xff]
        %v1102 = vld [vmem:[#allocation2 + $0x2c0] sm:$0xff]
        %v1103 = vld [vmem:[#allocation2 + $0x2c8] sm:$0xff]
        %v1104 = vld [vmem:[#allocation2 + $0x2d0] sm:$0xff]
        %v1105 = vld [vmem:[#allocation2 + $0x2d8] sm:$0xff]
        %v1106 = vld [vmem:[#allocation2 + $0x2e0] sm:$0xff]
        %v1107 = vld [vmem:[#allocation2 + $0x2e8] sm:$0xff]
        %v1108 = vld [vmem:[#allocation2 + $0x2f0] sm:$0xff]
        %v1109 = vld [vmem:[#allocation2 + $0x2f8] sm:$0xff]
        %v1110 = vld [vmem:[#allocation2 + $0x300] sm:$0xff]
        %v1111 = vld [vmem:[#allocation2 + $0x308] sm:$0xff]
        %v1112 = vld [vmem:[#allocation2 + $0x310] sm:$0xff]
        %v1113 = vld [vmem:[#allocation2 + $0x318] sm:$0xff]
        %v1114 = vld [vmem:[#allocation2 + $0x320] sm:$0xff]
        %v1115 = vld [vmem:[#allocation2 + $0x328] sm:$0xff]
        %v1116 = vld [vmem:[#allocation2 + $0x330] sm:$0xff]
        %v1117 = vld [vmem:[#allocation2 + $0x338] sm:$0xff]
        %v1118 = vld [vmem:[#allocation2 + $0x340] sm:$0xff]
        %v1119 = vld [vmem:[#allocation2 + $0x348] sm:$0xff]
        %v1120 = vld [vmem:[#allocation2 + $0x350] sm:$0xff]
        %v1121 = vld [vmem:[#allocation2 + $0x358] sm:$0xff]
        %v1122 = vld [vmem:[#allocation2 + $0x360] sm:$0xff]
        %v1123 = vld [vmem:[#allocation2 + $0x368] sm:$0xff]
        %v1124 = vld [vmem:[#allocation2 + $0x370] sm:$0xff]
        %v1125 = vld [vmem:[#allocation2 + $0x378] sm:$0xff]
        %v1126 = vld [vmem:[#allocation2 + $0x380] sm:$0xff]
        %v1127 = vld [vmem:[#allocation2 + $0x388] sm:$0xff]
        %v1128 = vld [vmem:[#allocation2 + $0x390] sm:$0xff]
        %v1129 = vld [vmem:[#allocation2 + $0x398] sm:$0xff]
        %v1130 = vld [vmem:[#allocation2 + $0x3a0] sm:$0xff]
        %v1131 = vld [vmem:[#allocation2 + $0x3a8] sm:$0xff]
        %v1132 = vld [vmem:[#allocation2 + $0x3b0] sm:$0xff]
        %v1133 = vld [vmem:[#allocation2 + $0x3b8] sm:$0xff]
        %v1134 = vld [vmem:[#allocation2 + $0x3c0] sm:$0xff]
        %v1135 = vld [vmem:[#allocation2 + $0x3c8] sm:$0xff]
        %v1136 = vld [vmem:[#allocation2 + $0x3d0] sm:$0xff]
        %v1137 = vld [vmem:[#allocation2 + $0x3d8] sm:$0xff]
        %v1138 = vld [vmem:[#allocation2 + $0x3e0] sm:$0xff]
        %v1139 = vld [vmem:[#allocation2 + $0x3e8] sm:$0xff]
        %v1140 = vld [vmem:[#allocation2 + $0x3f0] sm:$0xff]
        %v1141 = vld [vmem:[#allocation2 + $0x3f8] sm:$0xff]
        %v1142 = vld [vmem:[#allocation2 + $0x400] sm:$0xff]
        %v1143 = vld [vmem:[#allocation2 + $0x408] sm:$0xff]
        %v1144 = vld [vmem:[#allocation2 + $0x410] sm:$0xff]
        %v1145 = vld [vmem:[#allocation2 + $0x418] sm:$0xff]
        %v1146 = vld [vmem:[#allocation2 + $0x420] sm:$0xff]
        %v1147 = vld [vmem:[#allocation2 + $0x428] sm:$0xff]
        %v1148 = vld [vmem:[#allocation2 + $0x430] sm:$0xff]
        %v1149 = vld [vmem:[%s2] sm:$0xff]
        %1151 = vset.pattern.permute.xlu0 0
        %1152 = vperm.xlu0 %1151, %v1149
        %v1153 = vpop.permute.xlu0 %1152
        %vm1155 = vcmask 719872
        %v1157 = vsel %vm1155, %v1013, 0
        %1159 = vmatprep.subr.mxu0 %v1015
        %1160 = vmatpush1.msra.mxu0 %v1014
        %1161 = vmatprep.subr.mxu0 %v1020
        %1162 = vmatpush1.msra.mxu0 %v1019
        %1163 = vmatprep.subr.mxu0 %v1025
        %1164 = vmatpush1.msra.mxu0 %v1024
        %1165 = vmatprep.subr.mxu0 %v1030
        %1166 = vmatpush1.msra.mxu0 %v1029
        %1167 = vmatprep.subr.mxu0 %v1035
        %1168 = vmatpush1.msra.mxu0 %v1034
        %1169 = vmatprep.subr.mxu0 %v1040
        %1170 = vmatpush1.msra.mxu0 %v1039
        %1171 = vmatprep.subr.mxu0 %v1045
        %1172 = vmatpush1.msra.mxu0 %v1044
        %1173 = vmatprep.subr.mxu0 %v1050
        %1174 = vmatpush1.msra.mxu0 %v1049
        %1175 = vmatprep.subr.mxu0 %v1055
        %1176 = vmatpush1.msra.mxu0 %v1054
        %1177 = vmatprep.subr.mxu0 %v1060
        %1178 = vmatpush1.msra.mxu0 %v1059
        %1179 = vmatprep.subr.mxu0 %v1065
        %1180 = vmatpush1.msra.mxu0 %v1064
        %1181 = vmatprep.subr.mxu0 %v1070
        %1182 = vmatpush1.msra.mxu0 %v1069
        %1183 = vmatprep.subr.mxu0 %v1075
        %1184 = vmatpush1.msra.mxu0 %v1074
        %1185 = vmatprep.subr.mxu0 %v1080
        %1186 = vmatpush1.msra.mxu0 %v1079
        %1187 = vmatprep.subr.mxu0 %v1085
        %1188 = vmatpush1.msra.mxu0 %v1084
        %1189 = vmatprep.subr.mxu0 %v1090
        %1190 = vmatpush1.msra.mxu0 %v1089
        %1191 = vmatprep.subr.mxu0 %v1095
        %1192 = vmatpush1.msra.mxu0 %v1094
        %1193 = vmatprep.subr.mxu0 %v1100
        %1194 = vmatpush1.msra.mxu0 %v1099
        %1195 = vmatprep.subr.mxu0 %v1105
        %1196 = vmatpush1.msra.mxu0 %v1104
        %1197 = vmatprep.subr.mxu0 %v1110
        %1198 = vmatpush1.msra.mxu0 %v1109
        %1199 = vmatprep.subr.mxu0 %v1115
        %1200 = vmatpush1.msra.mxu0 %v1114
        %1201 = vmatprep.subr.mxu0 %v1120
        %1202 = vmatpush1.msra.mxu0 %v1119
        %1203 = vmatprep.subr.mxu0 %v1125
        %1204 = vmatpush1.msra.mxu0 %v1124
        %1205 = vmatprep.subr.mxu0 %v1130
        %1206 = vmatpush1.msra.mxu0 %v1129
        %1207 = vmatprep.subr.mxu0 %v1135
        %1208 = vmatpush1.msra.mxu0 %v1134
        %1209 = vmatprep.subr.mxu0 %v1140
        %1210 = vmatpush1.msra.mxu0 %v1139
        %1211 = vmatprep.subr.mxu0 %v1145
        %1212 = vmatpush1.msra.mxu0 %v1144
        %1213 = vmatprep.subr.mxu0 0.0
        %1214 = vmatpush1.msra.mxu0 0.0
        %1215 = vmatprep.subr.mxu0 0.0
        %1216 = vmatpush1.msra.mxu0 0.0
        %1217 = vmatprep.subr.mxu0 0.0
        %1218 = vmatpush1.msra.mxu0 0.0
        %1219 = vmatprep.subr.mxu0 0.0
        %1220 = vmatpush1.msra.mxu0 0.0
        %1221 = vmatprep.subr.mxu0 0.0
        %1222 = vmatpush1.msra.mxu0 0.0
        %1223 = vmatprep.mubr.f32.mxu0 %v1157
        %1224 = vmatmul.mubr.f32.gmra.mrb[0].mxu0 %v1012
        %v1225 = vpop.f32.mrb[0].mxu0
        %v1226 = vadd.f32 %v1153, %v1225
        %v1227 = vpop.f32.mrb[0].mxu0
        %v1228 = vadd.f32 %v1153, %v1227
        %1229 = vdwg.mxu0
        %1230 = vmatprep.subr.mxu0 %v1017
        %1231 = vmatpush1.msra.mxu0 %v1016
        %1232 = vmatprep.subr.mxu0 %v1022
        %1233 = vmatpush1.msra.mxu0 %v1021
        %1234 = vmatprep.subr.mxu0 %v1027
        %1235 = vmatpush1.msra.mxu0 %v1026
        %1236 = vmatprep.subr.mxu0 %v1032
        %1237 = vmatpush1.msra.mxu0 %v1031
        %1238 = vmatprep.subr.mxu0 %v1037
        %1239 = vmatpush1.msra.mxu0 %v1036
        %1240 = vmatprep.subr.mxu0 %v1042
        %1241 = vmatpush1.msra.mxu0 %v1041
        %1242 = vmatprep.subr.mxu0 %v1047
        %1243 = vmatpush1.msra.mxu0 %v1046
        %1244 = vmatprep.subr.mxu0 %v1052
        %1245 = vmatpush1.msra.mxu0 %v1051
        %1246 = vmatprep.subr.mxu0 %v1057
        %1247 = vmatpush1.msra.mxu0 %v1056
        %1248 = vmatprep.subr.mxu0 %v1062
        %1249 = vmatpush1.msra.mxu0 %v1061
        %1250 = vmatprep.subr.mxu0 %v1067
        %1251 = vmatpush1.msra.mxu0 %v1066
        %1252 = vmatprep.subr.mxu0 %v1072
        %1253 = vmatpush1.msra.mxu0 %v1071
        %1254 = vmatprep.subr.mxu0 %v1077
        %1255 = vmatpush1.msra.mxu0 %v1076
        %1256 = vmatprep.subr.mxu0 %v1082
        %1257 = vmatpush1.msra.mxu0 %v1081
        %1258 = vmatprep.subr.mxu0 %v1087
        %1259 = vmatpush1.msra.mxu0 %v1086
        %1260 = vmatprep.subr.mxu0 %v1092
        %1261 = vmatpush1.msra.mxu0 %v1091
        %1262 = vmatprep.subr.mxu0 %v1097
        %1263 = vmatpush1.msra.mxu0 %v1096
        %1264 = vmatprep.subr.mxu0 %v1102
        %1265 = vmatpush1.msra.mxu0 %v1101
        %1266 = vmatprep.subr.mxu0 %v1107
        %1267 = vmatpush1.msra.mxu0 %v1106
        %1268 = vmatprep.subr.mxu0 %v1112
        %1269 = vmatpush1.msra.mxu0 %v1111
        %1270 = vmatprep.subr.mxu0 %v1117
        %1271 = vmatpush1.msra.mxu0 %v1116
        %1272 = vmatprep.subr.mxu0 %v1122
        %1273 = vmatpush1.msra.mxu0 %v1121
        %1274 = vmatprep.subr.mxu0 %v1127
        %1275 = vmatpush1.msra.mxu0 %v1126
        %1276 = vmatprep.subr.mxu0 %v1132
        %1277 = vmatpush1.msra.mxu0 %v1131
        %1278 = vmatprep.subr.mxu0 %v1137
        %1279 = vmatpush1.msra.mxu0 %v1136
        %1280 = vmatprep.subr.mxu0 %v1142
        %1281 = vmatpush1.msra.mxu0 %v1141
        %1282 = vmatprep.subr.mxu0 %v1147
        %1283 = vmatpush1.msra.mxu0 %v1146
        %1284 = vmatprep.subr.mxu0 0.0
        %1285 = vmatpush1.msra.mxu0 0.0
        %1286 = vmatprep.subr.mxu0 0.0
        %1287 = vmatpush1.msra.mxu0 0.0
        %1288 = vmatprep.subr.mxu0 0.0
        %1289 = vmatpush1.msra.mxu0 0.0
        %1290 = vmatprep.subr.mxu0 0.0
        %1291 = vmatpush1.msra.mxu0 0.0
        %1292 = vmatprep.subr.mxu0 0.0
        %1293 = vmatpush1.msra.mxu0 0.0
        %1294 = vmatprep.mubr.f32.mxu0 %v1157
        %1295 = vmatmul.mubr.f32.gmra.mrb[0].mxu0 %v1012
        %v1296 = vpop.f32.mrb[0].mxu0
        %v1297 = vadd.f32 %v1153, %v1296
        %v1298 = vpop.f32.mrb[0].mxu0
        %v1299 = vadd.f32 %v1153, %v1298
        %1300 = vdwg.mxu0
        %1301 = vmatprep.subr.mxu0 0.0
        %1302 = vmatpush1.msra.mxu0 %v1018
        %1303 = vmatprep.subr.mxu0 0.0
        %1304 = vmatpush1.msra.mxu0 %v1023
        %1305 = vmatprep.subr.mxu0 0.0
        %1306 = vmatpush1.msra.mxu0 %v1028
        %1307 = vmatprep.subr.mxu0 0.0
        %1308 = vmatpush1.msra.mxu0 %v1033
        %1309 = vmatprep.subr.mxu0 0.0
        %1310 = vmatpush1.msra.mxu0 %v1038
        %1311 = vmatprep.subr.mxu0 0.0
        %1312 = vmatpush1.msra.mxu0 %v1043
        %1313 = vmatprep.subr.mxu0 0.0
        %1314 = vmatpush1.msra.mxu0 %v1048
        %1315 = vmatprep.subr.mxu0 0.0
        %1316 = vmatpush1.msra.mxu0 %v1053
        %1317 = vmatprep.subr.mxu0 0.0
        %1318 = vmatpush1.msra.mxu0 %v1058
        %1319 = vmatprep.subr.mxu0 0.0
        %1320 = vmatpush1.msra.mxu0 %v1063
        %1321 = vmatprep.subr.mxu0 0.0
        %1322 = vmatpush1.msra.mxu0 %v1068
        %1323 = vmatprep.subr.mxu0 0.0
        %1324 = vmatpush1.msra.mxu0 %v1073
        %1325 = vmatprep.subr.mxu0 0.0
        %1326 = vmatpush1.msra.mxu0 %v1078
        %1327 = vmatprep.subr.mxu0 0.0
        %1328 = vmatpush1.msra.mxu0 %v1083
        %1329 = vmatprep.subr.mxu0 0.0
        %1330 = vmatpush1.msra.mxu0 %v1088
        %1331 = vmatprep.subr.mxu0 0.0
        %1332 = vmatpush1.msra.mxu0 %v1093
        %1333 = vmatprep.subr.mxu0 0.0
        %1334 = vmatpush1.msra.mxu0 %v1098
        %1335 = vmatprep.subr.mxu0 0.0
        %1336 = vmatpush1.msra.mxu0 %v1103
        %1337 = vmatprep.subr.mxu0 0.0
        %1338 = vmatpush1.msra.mxu0 %v1108
        %1339 = vmatprep.subr.mxu0 0.0
        %1340 = vmatpush1.msra.mxu0 %v1113
        %1341 = vmatprep.subr.mxu0 0.0
        %1342 = vmatpush1.msra.mxu0 %v1118
        %1343 = vmatprep.subr.mxu0 0.0
        %1344 = vmatpush1.msra.mxu0 %v1123
        %1345 = vmatprep.subr.mxu0 0.0
        %1346 = vmatpush1.msra.mxu0 %v1128
        %1347 = vmatprep.subr.mxu0 0.0
        %1348 = vmatpush1.msra.mxu0 %v1133
        %1349 = vmatprep.subr.mxu0 0.0
        %1350 = vmatpush1.msra.mxu0 %v1138
        %1351 = vmatprep.subr.mxu0 0.0
        %1352 = vmatpush1.msra.mxu0 %v1143
        %1353 = vmatprep.subr.mxu0 0.0
        %1354 = vmatpush1.msra.mxu0 %v1148
        %1355 = vmatprep.subr.mxu0 0.0
        %1356 = vmatpush1.msra.mxu0 0.0
        %1357 = vmatprep.subr.mxu0 0.0
        %1358 = vmatpush1.msra.mxu0 0.0
        %1359 = vmatprep.subr.mxu0 0.0
        %1360 = vmatpush1.msra.mxu0 0.0
        %1361 = vmatprep.subr.mxu0 0.0
        %1362 = vmatpush1.msra.mxu0 0.0
        %1363 = vmatprep.subr.mxu0 0.0
        %1364 = vmatpush1.msra.mxu0 0.0
        %1365 = vmatprep.mubr.f32.mxu0 %v1157
        %1366 = vmatmul.mubr.f32.gmra.mrb[0].mxu0 %v1012
        %v1367 = vpop.f32.mrb[0].mxu0
        %v1368 = vadd.f32 %v1153, %v1367
        %v1369 = vpop.f32.mrb[0].mxu0
        %1370 = vdwg.mxu0
        %v1371 = vld [vmem:[%s5] sm:$0x1f]
        %v1372 = vld [vmem:[%s6] sm:$0xff]
        %v1374 = vlaneseq
        %v1375 = vshrl.u32 %v1374, 7
        %v1376 = vsub.s32 0, %v1375
        %v1377 = vrot.slane %v1371, %v1376
        %v1378 = vlaneseq
        %v1379 = vshrl.u32 %v1378, 7
        %v1380 = vsub.s32 1, %v1379
        %v1381 = vrot.slane %v1371, %v1380
        %v1382 = vlaneseq
        %v1383 = vshrl.u32 %v1382, 7
        %v1384 = vsub.s32 2, %v1383
        %v1385 = vrot.slane %v1371, %v1384
        %v1386 = vlaneseq
        %v1387 = vshrl.u32 %v1386, 7
        %v1388 = vsub.s32 3, %v1387
        %v1389 = vrot.slane %v1371, %v1388
        %v1390 = vlaneseq
        %v1391 = vshrl.u32 %v1390, 7
        %v1392 = vsub.s32 4, %v1391
        %v1393 = vrot.slane %v1371, %v1392
        %v1399 = vmul.f32 %v1226, %v1377
        %v1400 = vmul.f32 %v1228, %v1381
        %v1401 = vmul.f32 %v1297, %v1385
        %v1402 = vmul.f32 %v1299, %v1389
        %v1403 = vmul.f32 %v1368, %v1393
        %v1404 = vadd.f32 %v1399, %v1400
        %v1405 = vadd.f32 %v1404, %v1401
        %v1406 = vadd.f32 %v1405, %v1402
        %v1407 = vadd.f32 %v1406, %v1403
        %1408 = vadd.xlane.f32.xlu0 %v1407
        %v1409 = vpop.xlane.xlu0 %1408
        %vm1410 = vcmask 64512
        %v1412 = vsel %vm1410, %v1372, 0
        %1414 = vmatprep.subr.mxu0 0.0
        %1415 = vmatpush1.msra.mxu0 %v1409
        %1416 = vmatprep.subr.mxu0 0.0
        %1417 = vmatpush1.msra.mxu0 0.0
        %1418 = vmatprep.subr.mxu0 0.0
        %1419 = vmatpush1.msra.mxu0 0.0
        %1420 = vmatprep.subr.mxu0 0.0
        %1421 = vmatpush1.msra.mxu0 0.0
        %1422 = vmatprep.subr.mxu0 0.0
        %1423 = vmatpush1.msra.mxu0 0.0
        %1424 = vmatprep.subr.mxu0 0.0
        %1425 = vmatpush1.msra.mxu0 0.0
        %1426 = vmatprep.subr.mxu0 0.0
        %1427 = vmatpush1.msra.mxu0 0.0
        %1428 = vmatprep.subr.mxu0 0.0
        %1429 = vmatpush1.msra.mxu0 0.0
        %1430 = vmatprep.subr.mxu0 0.0
        %1431 = vmatpush1.msra.mxu0 0.0
        %1432 = vmatprep.subr.mxu0 0.0
        %1433 = vmatpush1.msra.mxu0 0.0
        %1434 = vmatprep.subr.mxu0 0.0
        %1435 = vmatpush1.msra.mxu0 0.0
        %1436 = vmatprep.subr.mxu0 0.0
        %1437 = vmatpush1.msra.mxu0 0.0
        %1438 = vmatprep.subr.mxu0 0.0
        %1439 = vmatpush1.msra.mxu0 0.0
        %1440 = vmatprep.subr.mxu0 0.0
        %1441 = vmatpush1.msra.mxu0 0.0
        %1442 = vmatprep.subr.mxu0 0.0
        %1443 = vmatpush1.msra.mxu0 0.0
        %1444 = vmatprep.subr.mxu0 0.0
        %1445 = vmatpush1.msra.mxu0 0.0
        %1446 = vmatprep.subr.mxu0 0.0
        %1447 = vmatpush1.msra.mxu0 0.0
        %1448 = vmatprep.subr.mxu0 0.0
        %1449 = vmatpush1.msra.mxu0 0.0
        %1450 = vmatprep.subr.mxu0 0.0
        %1451 = vmatpush1.msra.mxu0 0.0
        %1452 = vmatprep.subr.mxu0 0.0
        %1453 = vmatpush1.msra.mxu0 0.0
        %1454 = vmatprep.subr.mxu0 0.0
        %1455 = vmatpush1.msra.mxu0 0.0
        %1456 = vmatprep.subr.mxu0 0.0
        %1457 = vmatpush1.msra.mxu0 0.0
        %1458 = vmatprep.subr.mxu0 0.0
        %1459 = vmatpush1.msra.mxu0 0.0
        %1460 = vmatprep.subr.mxu0 0.0
        %1461 = vmatpush1.msra.mxu0 0.0
        %1462 = vmatprep.subr.mxu0 0.0
        %1463 = vmatpush1.msra.mxu0 0.0
        %1464 = vmatprep.subr.mxu0 0.0
        %1465 = vmatpush1.msra.mxu0 0.0
        %1466 = vmatprep.subr.mxu0 0.0
        %1467 = vmatpush1.msra.mxu0 0.0
        %1468 = vmatprep.subr.mxu0 0.0
        %1469 = vmatpush1.msra.mxu0 0.0
        %1470 = vmatprep.subr.mxu0 0.0
        %1471 = vmatpush1.msra.mxu0 0.0
        %1472 = vmatprep.subr.mxu0 0.0
        %1473 = vmatpush1.msra.mxu0 0.0
        %1474 = vmatprep.subr.mxu0 0.0
        %1475 = vmatpush1.msra.mxu0 0.0
        %1476 = vmatprep.subr.mxu0 0.0
        %1477 = vmatpush1.msra.mxu0 0.0
        %1478 = vmatprep.mubr.f32.mxu0 0.0
        %1479 = vmatmul.mubr.f32.gmra.mrb[0].mxu0 %v1412
        %v1480 = vpop.f32.mrb[0].mxu0
        %v1481 = vadd.f32 0.0, %v1480
        %v1482 = vpop.f32.mrb[0].mxu0
        %1483 = vdwg.mxu0
        %1485 = vset.pattern.permute.xlu0 0
        %1486 = vperm.xlu0 %1485, %v1481
        %v1487 = vpop.permute.xlu0 %1486
        %v1489 = vsub.f32 %v1226, %v1487
        %v1490 = vsub.f32 %v1228, %v1487
        %v1491 = vsub.f32 %v1297, %v1487
        %v1492 = vsub.f32 %v1299, %v1487
        %v1493 = vsub.f32 %v1368, %v1487
        %v1494 = vmul.f32 %v1489, %v1377
        %v1495 = vmul.f32 %v1490, %v1381
        %v1496 = vmul.f32 %v1491, %v1385
        %v1497 = vmul.f32 %v1492, %v1389
        %v1498 = vmul.f32 %v1493, %v1393
        %v1499 = vmul.f32 %v1494, %v1494
        %v1500 = vmul.f32 %v1495, %v1495
        %v1501 = vmul.f32 %v1496, %v1496
        %v1502 = vmul.f32 %v1497, %v1497
        %v1503 = vmul.f32 %v1498, %v1498
        %v1504 = vadd.f32 %v1499, %v1500
        %v1505 = vadd.f32 %v1504, %v1501
        %v1506 = vadd.f32 %v1505, %v1502
        %v1507 = vadd.f32 %v1506, %v1503
        %1508 = vadd.xlane.f32.xlu0 %v1507
        %v1509 = vpop.xlane.xlu0 %1508
        %1510 = vmatprep.subr.mxu0 0.0
        %1511 = vmatpush1.msra.mxu0 %v1509
        %1512 = vmatprep.subr.mxu0 0.0
        %1513 = vmatpush1.msra.mxu0 0.0
        %1514 = vmatprep.subr.mxu0 0.0
        %1515 = vmatpush1.msra.mxu0 0.0
        %1516 = vmatprep.subr.mxu0 0.0
        %1517 = vmatpush1.msra.mxu0 0.0
        %1518 = vmatprep.subr.mxu0 0.0
        %1519 = vmatpush1.msra.mxu0 0.0
        %1520 = vmatprep.subr.mxu0 0.0
        %1521 = vmatpush1.msra.mxu0 0.0
        %1522 = vmatprep.subr.mxu0 0.0
        %1523 = vmatpush1.msra.mxu0 0.0
        %1524 = vmatprep.subr.mxu0 0.0
        %1525 = vmatpush1.msra.mxu0 0.0
        %1526 = vmatprep.subr.mxu0 0.0
        %1527 = vmatpush1.msra.mxu0 0.0
        %1528 = vmatprep.subr.mxu0 0.0
        %1529 = vmatpush1.msra.mxu0 0.0
        %1530 = vmatprep.subr.mxu0 0.0
        %1531 = vmatpush1.msra.mxu0 0.0
        %1532 = vmatprep.subr.mxu0 0.0
        %1533 = vmatpush1.msra.mxu0 0.0
        %1534 = vmatprep.subr.mxu0 0.0
        %1535 = vmatpush1.msra.mxu0 0.0
        %1536 = vmatprep.subr.mxu0 0.0
        %1537 = vmatpush1.msra.mxu0 0.0
        %1538 = vmatprep.subr.mxu0 0.0
        %1539 = vmatpush1.msra.mxu0 0.0
        %1540 = vmatprep.subr.mxu0 0.0
        %1541 = vmatpush1.msra.mxu0 0.0
        %1542 = vmatprep.subr.mxu0 0.0
        %1543 = vmatpush1.msra.mxu0 0.0
        %1544 = vmatprep.subr.mxu0 0.0
        %1545 = vmatpush1.msra.mxu0 0.0
        %1546 = vmatprep.subr.mxu0 0.0
        %1547 = vmatpush1.msra.mxu0 0.0
        %1548 = vmatprep.subr.mxu0 0.0
        %1549 = vmatpush1.msra.mxu0 0.0
        %1550 = vmatprep.subr.mxu0 0.0
        %1551 = vmatpush1.msra.mxu0 0.0
        %1552 = vmatprep.subr.mxu0 0.0
        %1553 = vmatpush1.msra.mxu0 0.0
        %1554 = vmatprep.subr.mxu0 0.0
        %1555 = vmatpush1.msra.mxu0 0.0
        %1556 = vmatprep.subr.mxu0 0.0
        %1557 = vmatpush1.msra.mxu0 0.0
        %1558 = vmatprep.subr.mxu0 0.0
        %1559 = vmatpush1.msra.mxu0 0.0
        %1560 = vmatprep.subr.mxu0 0.0
        %1561 = vmatpush1.msra.mxu0 0.0
        %1562 = vmatprep.subr.mxu0 0.0
        %1563 = vmatpush1.msra.mxu0 0.0
        %1564 = vmatprep.subr.mxu0 0.0
        %1565 = vmatpush1.msra.mxu0 0.0
        %1566 = vmatprep.subr.mxu0 0.0
        %1567 = vmatpush1.msra.mxu0 0.0
        %1568 = vmatprep.subr.mxu0 0.0
        %1569 = vmatpush1.msra.mxu0 0.0
        %1570 = vmatprep.subr.mxu0 0.0
        %1571 = vmatpush1.msra.mxu0 0.0
        %1572 = vmatprep.subr.mxu0 0.0
        %1573 = vmatpush1.msra.mxu0 0.0
        %1574 = vmatprep.mubr.f32.mxu0 0.0
        %1575 = vmatmul.mubr.f32.gmra.mrb[0].mxu0 %v1412
        %v1576 = vpop.f32.mrb[0].mxu0
        %v1577 = vadd.f32 1e-05, %v1576
        %v1578 = vpop.f32.mrb[0].mxu0
        %1579 = vdwg.mxu0
        %v1580 = vrsqrt.pop %v1577
        %v1581 = vld [vmem:[%s3] sm:$0xff]
        %v1582 = vmul.f32 %v1580, %v1581
        %v1583 = vld [vmem:[%s4] sm:$0xff]
        %v1584 = vmul.f32 %v1481, %v1582
        %v1585 = vsub.f32 %v1583, %v1584
        %1587 = vset.pattern.permute.xlu0 0
        %1588 = vperm.xlu0 %1587, %v1582
        %v1589 = vpop.permute.xlu0 %1588
        %v1591 = vmul.f32 %v1226, %v1589
        %v1592 = vmul.f32 %v1228, %v1589
        %v1593 = vmul.f32 %v1297, %v1589
        %v1594 = vmul.f32 %v1299, %v1589
        %v1595 = vmul.f32 %v1368, %v1589
        %1597 = vset.pattern.permute.xlu0 0
        %1598 = vperm.xlu0 %1597, %v1585
        %v1599 = vpop.permute.xlu0 %1598
        %v1601 = vadd.f32 %v1591, %v1599
        %v1602 = vadd.f32 %v1592, %v1599
        %v1603 = vadd.f32 %v1593, %v1599
        %v1604 = vadd.f32 %v1594, %v1599
        %v1605 = vadd.f32 %v1595, %v1599
        %v1606 = vmax.f32 %v1601, 0.0
        %v1607 = vmax.f32 %v1602, 0.0
        %v1608 = vmax.f32 %v1603, 0.0
        %v1609 = vmax.f32 %v1604, 0.0
        %v1610 = vmax.f32 %v1605, 0.0
        %1611 = vst [vmem:[%s294] sm:$0xff] %v1606
        %1612 = vst [vmem:[%s294 + $0x8] sm:$0xff] %v1607
        %1613 = vst [vmem:[%s294 + $0x10] sm:$0xff] %v1608
        %1614 = vst [vmem:[%s294 + $0x18] sm:$0xff] %v1609
        %1615 = vst [vmem:[%s294 + $0x20] sm:$0xff] %v1610
        %s1616 = sand.u32 %s184, 1
        %s1617 = scalar_lea.sflag [#allocation5], %s1616
        %s1618 = sand.u32 %s184, 1
        %s1619 = smul.addr %s1618, 40
        %s1620 = scalar_lea.vmem [#allocation6], %s1619
        // Predicated region
        $region53: #{tpu_custom_call.1} parent=47 // pred_check
          %p1621 = pneg %p194
        $region54: #{tpu_custom_call.1} parent=47 // pred_check_branch
          %1623 = sbr.rel (%p1621) target = $region56
        $region55: #{tpu_custom_call.1} parent=47 // pred_region
          %s1625 = ssub.s32 640, 640
          %1626 = vsyncadd %s1617, %s1625
          %s1627 = smul.addr %s24, 5
          %s1628 = smul.addr %s1627, 128
          %s1629 = scalar_lea.hbm %s7, %s1628
          %s1631 = sshll.u32 %s1620, 4
          %s1632 = int_to_ptr.vmem [resolvable:$true] %s1631
          %1634 = dma.vmem_to_hbm [thread:$0]  %s1632, 640, %s1629, %s1617
        $region56: #{tpu_custom_call.1} parent=47 // pred_fallthru
          _
      $region48: #{tpu_custom_call.1} parent=5 // pred_fallthru
        _
      %p1635 = scmp.le.s32.totalorder 2, %s19
      // Predicated region
      $region57: #{tpu_custom_call.1} parent=5 // pred_check
        %p1636 = pneg %p1635
      $region58: #{tpu_custom_call.1} parent=5 // pred_check_branch
        %1638 = sbr.rel (%p1636) target = $region60
      $region59: #{tpu_custom_call.1} parent=5 // pred_region
        %s1639 = ssub.s32 %s19, 2
        // Predicated region
        $region61: #{tpu_custom_call.1} parent=59 // pred_check
          %p1640 = pneg %p200
        $region62: #{tpu_custom_call.1} parent=59 // pred_check_branch
          %1642 = sbr.rel (%p1640) target = $region64
        $region63: #{tpu_custom_call.1} parent=59 // pred_region
          %s1643 = sand.u32 %s185, 1
          %s1644 = scalar_lea.sflag [#allocation5], %s1643
          %s1645 = sand.u32 %s185, 1
          %s1646 = smul.addr %s1645, 40
          %s1647 = scalar_lea.vmem [#allocation6], %s1646
          %1648 = dma.done %s1644, 640
        $region64: #{tpu_custom_call.1} parent=59 // pred_fallthru
          _
      $region60: #{tpu_custom_call.1} parent=5 // pred_fallthru
        _
    $region6: #{tpu_custom_call.1} parent=1 // loop_footer
      %s23 = sadd.s32 1, %s19
    $region7: #{tpu_custom_call.1} parent=1 // loop_footer_branch
      %18 = sbr.rel target = $region3
    $region8: #{tpu_custom_call.1} parent=1 // loop_exit
      _
    %1649 = vsyncpa [#allocation4], 1
    %s1650 = scalar_lea.sflag [#allocation4], 1
    %1651 = vsyncpa %s1650, 1
    %1652 = vsyncpa [#allocation5], 1
    %s1653 = scalar_lea.sflag [#allocation5], 1
    %1654 = vsyncpa %s1653, 1

</llo_original>
